<compile_context>
chip_gen: v5e
topology: v5e:2x2
jax: 0.10.0
libtpu: 0.0.40
codegen_flags: <defaults>
</compile_context>

<pallas_src>
import functools

import jax
import jax.numpy as jnp
import numpy as np
from jax.experimental import pallas as pl
from jax.experimental.pallas import tpu as pltpu


def gtb_kernel(x_ref, w_ref, bqkv_ref, w1_ref, b1_ref, out_ref,
               xp_ref, col_ref, *, H, W, C, TB):
    # x_ref/out_ref: (TB, H, W, C)   single x stream; residual in native layout
    # w_ref:         (9*C, 3*C)      fused im2col weights, columns [Wq | Wk | Wv]
    # bqkv_ref:      (1, 3*C)        fused biases          [bq | bk | bv]
    # w1_ref: (1, C)   b1_ref: (1, 1)
    # xp_ref:  VMEM scratch (TB, H+2, W+2, C)  zero-halo buffer
    # col_ref: VMEM scratch (TB*H*W, 9*C)      im2col buffer
    HW = H * W
    f32 = jnp.float32

    # ---- halo: zero the 1-pixel border (4 tiny stores), copy the interior ----
    xp_ref[:, 0:1, :, :] = jnp.zeros((TB, 1, W + 2, C), f32)
    xp_ref[:, H + 1:H + 2, :, :] = jnp.zeros((TB, 1, W + 2, C), f32)
    xp_ref[:, :, 0:1, :] = jnp.zeros((TB, H + 2, 1, C), f32)
    xp_ref[:, :, W + 1:W + 2, :] = jnp.zeros((TB, H + 2, 1, C), f32)
    xp_ref[:, 1:H + 1, 1:W + 1, :] = x_ref[...]

    # ---- im2col into scratch: tap t = 3*dy + dx -> column block t*C:(t+1)*C ----
    # One tap live at a time (no concatenates).  The (TB,H,W,C)->(TB*HW,C) merge
    # of leading dims is layout-preserving because W is a multiple of 8.
    for t in range(9):
        dy, dx = divmod(t, 3)
        tap = xp_ref[:, dy:dy + H, dx:dx + W, :]                 # (TB, H, W, C)
        col_ref[:, t * C:(t + 1) * C] = tap.reshape(TB * HW, C)

    # ---- all three 3x3 convs in ONE MXU matmul (+ fused biases) ----
    qkvm = jnp.dot(col_ref[...], w_ref[...],
                   preferred_element_type=f32) + bqkv_ref[...]   # (TB*HW, 3C)

    # Global average pool as an MXU matmul (1/HW folded into the ones row).
    pool_row = jnp.full((1, HW), 1.0 / HW, dtype=f32)

    for b in range(TB):
        rows = qkvm[b * HW:(b + 1) * HW, :]                      # (HW, 3C)
        Qm = rows[:, 0:C]
        Km = rows[:, C:2 * C]
        Vm = rows[:, 2 * C:3 * C]

        # Q branch: global average pool -> (1, C), on the MXU.
        q = jnp.dot(pool_row, Qm, preferred_element_type=f32)

        # scores as a lane-dense (1, HW) row; softmax along the lane axis.
        scores = jnp.einsum("qc,lc->ql", q, Km,
                            preferred_element_type=f32)          # (1, HW)
        m = jnp.max(scores, axis=1, keepdims=True)
        e = jnp.exp(scores - m)
        p = e * pl.reciprocal(jnp.sum(e, axis=1, keepdims=True), approx=True)

        # qkv = p @ V : K = HW fully-utilised MXU contraction -> (1, C)
        qkv = jnp.dot(p, Vm, preferred_element_type=f32)

        # 1x1 conv C -> 1 on a (C,1,1) tensor == dot with w1 plus bias -> (1, 1)
        sc = jnp.sum(qkv * w1_ref[...], axis=1, keepdims=True) + b1_ref[...]

        # residual: per-image scalar broadcast, stored in x's native layout.
        out_ref[b] = x_ref[b] + sc.reshape(1, 1, 1)


def global_transformer_block(x, wq, bq, wk, bk, wv, bv, w1, b1, *, num_steps=None):
    """x: (B,H,W,C) f32 NHWC; wq/wk/wv: (3,3,C,C) HWIO; bq/bk/bv: (C,); w1: (C,); b1: (1,)."""
    B, H, W, C = x.shape
    if num_steps is None:
        # >= 2 parallel grid steps keeps both TensorCores busy on dual-TC chips
        # (v7x).  On single-TC parts (v5e/v6e) pass num_steps=1 to fold the
        # whole batch into one step (amortises per-step overhead).
        num_steps = 2 if (B >= 2 and B % 2 == 0) else 1
    TB = B // num_steps

    # Fused im2col weights: row index = t*C + cin (t = 3*dy + dx), cols [Q|K|V].
    w_fused = jnp.concatenate(
        [wq.reshape(9, C, C), wk.reshape(9, C, C), wv.reshape(9, C, C)],
        axis=2).reshape(9 * C, 3 * C)
    bqkv = jnp.concatenate([bq, bk, bv]).reshape(1, 3 * C)

    grid_spec = pltpu.PrefetchScalarGridSpec(
        num_scalar_prefetch=0,
        grid=(num_steps,),
        in_specs=[
            pl.BlockSpec((TB, H, W, C), lambda s: (s, 0, 0, 0)),   # x (single stream)
            pl.BlockSpec((9 * C, 3 * C), lambda s: (0, 0)),        # fused QKV weights
            pl.BlockSpec((1, 3 * C), lambda s: (0, 0)),            # fused QKV biases
            pl.BlockSpec((1, C), lambda s: (0, 0)),                # w1
            pl.BlockSpec((1, 1), lambda s: (0, 0)),                # b1
        ],
        out_specs=pl.BlockSpec((TB, H, W, C), lambda s: (s, 0, 0, 0)),
        scratch_shapes=[
            pltpu.VMEM((TB, H + 2, W + 2, C), jnp.float32),        # zero-halo buffer
            pltpu.VMEM((TB * H * W, 9 * C), jnp.float32),          # im2col buffer
        ],
    )

    return pl.pallas_call(
        functools.partial(gtb_kernel, H=H, W=W, C=C, TB=TB),
        out_shape=jax.ShapeDtypeStruct((B, H, W, C), jnp.float32),
        grid_spec=grid_spec,
        compiler_params=pltpu.CompilerParams(
            dimension_semantics=("parallel",)),
    )(x, w_fused, bqkv, w1.reshape(1, C), b1.reshape(1, 1))


def reference_forward(x, wq, bq, wk, bk, wv, bv, w1, b1):
    """Pure-JAX reference (NHWC) mirroring the PyTorch forward."""
    B, H, W, C = x.shape

    def conv3(inp, w, b):
        y = jax.lax.conv_general_dilated(
            inp, w, window_strides=(1, 1), padding="SAME",
            dimension_numbers=("NHWC", "HWIO", "NHWC"))
        return y + b

    Q = conv3(x, wq, bq)
    q = Q.mean(axis=(1, 2))                             # (B, C) global avg pool
    K = conv3(x, wk, bk).reshape(B, H * W, C)
    V = conv3(x, wv, bv).reshape(B, H * W, C)
    scores = jnp.einsum("blc,bc->bl", K, q)
    p = jax.nn.softmax(scores, axis=1)
    qkv = jnp.einsum("bl,blc->bc", p, V)                # (B, C)
    sc = jnp.sum(qkv * w1[None, :], axis=1, keepdims=True) + b1[None, :]  # (B, 1)
    return x + sc[:, None, None, :]                     # broadcast per-batch scalar


if __name__ == "__main__":
    B, H, W, C = 2, 16, 16, 8

    key = jax.random.PRNGKey(0)
    keys = jax.random.split(key, 9)
    x = jax.random.normal(keys[0], (B, H, W, C), dtype=jnp.float32)
    wq = jax.random.normal(keys[1], (3, 3, C, C), dtype=jnp.float32) * 0.1
    bq = jax.random.normal(keys[2], (C,), dtype=jnp.float32) * 0.1
    wk = jax.random.normal(keys[3], (3, 3, C, C), dtype=jnp.float32) * 0.1
    bk = jax.random.normal(keys[4], (C,), dtype=jnp.float32) * 0.1
    wv = jax.random.normal(keys[5], (3, 3, C, C), dtype=jnp.float32) * 0.1
    bv = jax.random.normal(keys[6], (C,), dtype=jnp.float32) * 0.1
    w1 = jax.random.normal(keys[7], (C,), dtype=jnp.float32) * 0.1
    b1 = jax.random.normal(keys[8], (1,), dtype=jnp.float32) * 0.1

    out = global_transformer_block(x, wq, bq, wk, bk, wv, bv, w1, b1)
    out = jax.block_until_ready(out)

    ref = reference_forward(x, wq, bq, wk, bk, wv, bv, w1, b1)
    np.testing.assert_allclose(np.asarray(out), np.asarray(ref),
                               rtol=2e-3, atol=2e-3)
    print("KERNEL_OK")
</pallas_src>

<mosaic_0001>
module attributes {stable_mosaic.version = 11 : i64} {
  func.func @gtb_kernel(%arg0: i32, %arg1: memref<1x16x16x8xf32, #tpu.memory_space<vmem>>, %arg2: memref<72x24xf32, #tpu.memory_space<vmem>>, %arg3: memref<1x24xf32, #tpu.memory_space<vmem>>, %arg4: memref<1x8xf32, #tpu.memory_space<vmem>>, %arg5: memref<1x1xf32, #tpu.memory_space<vmem>>, %arg6: memref<1x16x16x8xf32, #tpu.memory_space<vmem>>, %arg7: memref<1x18x18x8xf32, #tpu.memory_space<vmem>>, %arg8: memref<256x72xf32, #tpu.memory_space<vmem>>) attributes {dimension_semantics = [#tpu.dimension_semantics<parallel>], iteration_bounds = array<i64: 2>, scalar_prefetch = 0 : i64, scratch_operands = 2 : i64, tpu.core_type = #tpu.core_type<tc>, window_params = [{transform_indices = @transform_0, window_bounds = array<i64: 1, 16, 16, 8>}, {pipeline_mode = #tpu.pipeline_mode<synchronous>, transform_indices = @transform_1, window_bounds = array<i64: 72, 24>}, {pipeline_mode = #tpu.pipeline_mode<synchronous>, transform_indices = @transform_2, window_bounds = array<i64: 1, 24>}, {pipeline_mode = #tpu.pipeline_mode<synchronous>, transform_indices = @transform_3, window_bounds = array<i64: 1, 8>}, {pipeline_mode = #tpu.pipeline_mode<synchronous>, transform_indices = @transform_4, window_bounds = array<i64: 1, 1>}, {transform_indices = @transform_5, window_bounds = array<i64: 1, 16, 16, 8>}]} {
    %cst = arith.constant 0.000000e+00 : f32
    %0 = vector.broadcast %cst : f32 to vector<1x1x18x8xf32>
    %c0 = arith.constant 0 : index
    %c0_0 = arith.constant 0 : index
    %c0_1 = arith.constant 0 : index
    %c0_2 = arith.constant 0 : index
    %1 = vector.load %arg7[%c0, %c0_0, %c0_1, %c0_2] : memref<1x18x18x8xf32, #tpu.memory_space<vmem>>, vector<1x1x18x8xf32>
    tpu.vector_store %arg7[%c0, %c0_0, %c0_1, %c0_2], %0 {strides = array<i32>} : memref<1x18x18x8xf32, #tpu.memory_space<vmem>>, vector<1x1x18x8xf32>,
    %cst_3 = arith.constant 0.000000e+00 : f32
    %2 = vector.broadcast %cst_3 : f32 to vector<1x1x18x8xf32>
    %c0_4 = arith.constant 0 : index
    %c17 = arith.constant 17 : index
    %c0_5 = arith.constant 0 : index
    %c0_6 = arith.constant 0 : index
    %3 = vector.load %arg7[%c0_4, %c17, %c0_5, %c0_6] : memref<1x18x18x8xf32, #tpu.memory_space<vmem>>, vector<1x1x18x8xf32>
    tpu.vector_store %arg7[%c0_4, %c17, %c0_5, %c0_6], %2 {strides = array<i32>} : memref<1x18x18x8xf32, #tpu.memory_space<vmem>>, vector<1x1x18x8xf32>,
    %cst_7 = arith.constant 0.000000e+00 : f32
    %4 = vector.broadcast %cst_7 : f32 to vector<1x18x1x8xf32>
    %c0_8 = arith.constant 0 : index
    %c0_9 = arith.constant 0 : index
    %c0_10 = arith.constant 0 : index
    %c0_11 = arith.constant 0 : index
    %5 = vector.load %arg7[%c0_8, %c0_9, %c0_10, %c0_11] : memref<1x18x18x8xf32, #tpu.memory_space<vmem>>, vector<1x18x1x8xf32>
    tpu.vector_store %arg7[%c0_8, %c0_9, %c0_10, %c0_11], %4 {strides = array<i32>} : memref<1x18x18x8xf32, #tpu.memory_space<vmem>>, vector<1x18x1x8xf32>,
    %cst_12 = arith.constant 0.000000e+00 : f32
    %6 = vector.broadcast %cst_12 : f32 to vector<1x18x1x8xf32>
    %c0_13 = arith.constant 0 : index
    %c0_14 = arith.constant 0 : index
    %c17_15 = arith.constant 17 : index
    %c0_16 = arith.constant 0 : index
    %7 = vector.load %arg7[%c0_13, %c0_14, %c17_15, %c0_16] : memref<1x18x18x8xf32, #tpu.memory_space<vmem>>, vector<1x18x1x8xf32>
    tpu.vector_store %arg7[%c0_13, %c0_14, %c17_15, %c0_16], %6 {strides = array<i32>} : memref<1x18x18x8xf32, #tpu.memory_space<vmem>>, vector<1x18x1x8xf32>,
    %c0_17 = arith.constant 0 : index
    %c0_18 = arith.constant 0 : index
    %c0_19 = arith.constant 0 : index
    %c0_20 = arith.constant 0 : index
    %8 = vector.load %arg1[%c0_17, %c0_18, %c0_19, %c0_20] : memref<1x16x16x8xf32, #tpu.memory_space<vmem>>, vector<1x16x16x8xf32>
    %c0_21 = arith.constant 0 : index
    %c1 = arith.constant 1 : index
    %c1_22 = arith.constant 1 : index
    %c0_23 = arith.constant 0 : index
    %9 = vector.load %arg7[%c0_21, %c1, %c1_22, %c0_23] : memref<1x18x18x8xf32, #tpu.memory_space<vmem>>, vector<1x16x16x8xf32>
    tpu.vector_store %arg7[%c0_21, %c1, %c1_22, %c0_23], %8 {strides = array<i32>} : memref<1x18x18x8xf32, #tpu.memory_space<vmem>>, vector<1x16x16x8xf32>,
    %c0_24 = arith.constant 0 : index
    %c0_25 = arith.constant 0 : index
    %c0_26 = arith.constant 0 : index
    %c0_27 = arith.constant 0 : index
    %10 = vector.load %arg7[%c0_24, %c0_25, %c0_26, %c0_27] : memref<1x18x18x8xf32, #tpu.memory_space<vmem>>, vector<1x16x16x8xf32>
    %11 = vector.shape_cast %10 : vector<1x16x16x8xf32> to vector<256x8xf32>
    %c0_28 = arith.constant 0 : index
    %c0_29 = arith.constant 0 : index
    %12 = vector.load %arg8[%c0_28, %c0_29] : memref<256x72xf32, #tpu.memory_space<vmem>>, vector<256x8xf32>
    tpu.vector_store %arg8[%c0_28, %c0_29], %11 {strides = array<i32>} : memref<256x72xf32, #tpu.memory_space<vmem>>, vector<256x8xf32>,
    %c0_30 = arith.constant 0 : index
    %c0_31 = arith.constant 0 : index
    %c1_32 = arith.constant 1 : index
    %c0_33 = arith.constant 0 : index
    %13 = vector.load %arg7[%c0_30, %c0_31, %c1_32, %c0_33] : memref<1x18x18x8xf32, #tpu.memory_space<vmem>>, vector<1x16x16x8xf32>
    %14 = vector.shape_cast %13 : vector<1x16x16x8xf32> to vector<256x8xf32>
    %c0_34 = arith.constant 0 : index
    %c8 = arith.constant 8 : index
    %15 = vector.load %arg8[%c0_34, %c8] : memref<256x72xf32, #tpu.memory_space<vmem>>, vector<256x8xf32>
    tpu.vector_store %arg8[%c0_34, %c8], %14 {strides = array<i32>} : memref<256x72xf32, #tpu.memory_space<vmem>>, vector<256x8xf32>,
    %c0_35 = arith.constant 0 : index
    %c0_36 = arith.constant 0 : index
    %c2 = arith.constant 2 : index
    %c0_37 = arith.constant 0 : index
    %16 = vector.load %arg7[%c0_35, %c0_36, %c2, %c0_37] : memref<1x18x18x8xf32, #tpu.memory_space<vmem>>, vector<1x16x16x8xf32>
    %17 = vector.shape_cast %16 : vector<1x16x16x8xf32> to vector<256x8xf32>
    %c0_38 = arith.constant 0 : index
    %c16 = arith.constant 16 : index
    %18 = vector.load %arg8[%c0_38, %c16] : memref<256x72xf32, #tpu.memory_space<vmem>>, vector<256x8xf32>
    tpu.vector_store %arg8[%c0_38, %c16], %17 {strides = array<i32>} : memref<256x72xf32, #tpu.memory_space<vmem>>, vector<256x8xf32>,
    %c0_39 = arith.constant 0 : index
    %c1_40 = arith.constant 1 : index
    %c0_41 = arith.constant 0 : index
    %c0_42 = arith.constant 0 : index
    %19 = vector.load %arg7[%c0_39, %c1_40, %c0_41, %c0_42] : memref<1x18x18x8xf32, #tpu.memory_space<vmem>>, vector<1x16x16x8xf32>
    %20 = vector.shape_cast %19 : vector<1x16x16x8xf32> to vector<256x8xf32>
    %c0_43 = arith.constant 0 : index
    %c24 = arith.constant 24 : index
    %21 = vector.load %arg8[%c0_43, %c24] : memref<256x72xf32, #tpu.memory_space<vmem>>, vector<256x8xf32>
    tpu.vector_store %arg8[%c0_43, %c24], %20 {strides = array<i32>} : memref<256x72xf32, #tpu.memory_space<vmem>>, vector<256x8xf32>,
    %c0_44 = arith.constant 0 : index
    %c1_45 = arith.constant 1 : index
    %c1_46 = arith.constant 1 : index
    %c0_47 = arith.constant 0 : index
    %22 = vector.load %arg7[%c0_44, %c1_45, %c1_46, %c0_47] : memref<1x18x18x8xf32, #tpu.memory_space<vmem>>, vector<1x16x16x8xf32>
    %23 = vector.shape_cast %22 : vector<1x16x16x8xf32> to vector<256x8xf32>
    %c0_48 = arith.constant 0 : index
    %c32 = arith.constant 32 : index
    %24 = vector.load %arg8[%c0_48, %c32] : memref<256x72xf32, #tpu.memory_space<vmem>>, vector<256x8xf32>
    tpu.vector_store %arg8[%c0_48, %c32], %23 {strides = array<i32>} : memref<256x72xf32, #tpu.memory_space<vmem>>, vector<256x8xf32>,
    %c0_49 = arith.constant 0 : index
    %c1_50 = arith.constant 1 : index
    %c2_51 = arith.constant 2 : index
    %c0_52 = arith.constant 0 : index
    %25 = vector.load %arg7[%c0_49, %c1_50, %c2_51, %c0_52] : memref<1x18x18x8xf32, #tpu.memory_space<vmem>>, vector<1x16x16x8xf32>
    %26 = vector.shape_cast %25 : vector<1x16x16x8xf32> to vector<256x8xf32>
    %c0_53 = arith.constant 0 : index
    %c40 = arith.constant 40 : index
    %27 = vector.load %arg8[%c0_53, %c40] : memref<256x72xf32, #tpu.memory_space<vmem>>, vector<256x8xf32>
    tpu.vector_store %arg8[%c0_53, %c40], %26 {strides = array<i32>} : memref<256x72xf32, #tpu.memory_space<vmem>>, vector<256x8xf32>,
    %c0_54 = arith.constant 0 : index
    %c2_55 = arith.constant 2 : index
    %c0_56 = arith.constant 0 : index
    %c0_57 = arith.constant 0 : index
    %28 = vector.load %arg7[%c0_54, %c2_55, %c0_56, %c0_57] : memref<1x18x18x8xf32, #tpu.memory_space<vmem>>, vector<1x16x16x8xf32>
    %29 = vector.shape_cast %28 : vector<1x16x16x8xf32> to vector<256x8xf32>
    %c0_58 = arith.constant 0 : index
    %c48 = arith.constant 48 : index
    %30 = vector.load %arg8[%c0_58, %c48] : memref<256x72xf32, #tpu.memory_space<vmem>>, vector<256x8xf32>
    tpu.vector_store %arg8[%c0_58, %c48], %29 {strides = array<i32>} : memref<256x72xf32, #tpu.memory_space<vmem>>, vector<256x8xf32>,
    %c0_59 = arith.constant 0 : index
    %c2_60 = arith.constant 2 : index
    %c1_61 = arith.constant 1 : index
    %c0_62 = arith.constant 0 : index
    %31 = vector.load %arg7[%c0_59, %c2_60, %c1_61, %c0_62] : memref<1x18x18x8xf32, #tpu.memory_space<vmem>>, vector<1x16x16x8xf32>
    %32 = vector.shape_cast %31 : vector<1x16x16x8xf32> to vector<256x8xf32>
    %c0_63 = arith.constant 0 : index
    %c56 = arith.constant 56 : index
    %33 = vector.load %arg8[%c0_63, %c56] : memref<256x72xf32, #tpu.memory_space<vmem>>, vector<256x8xf32>
    tpu.vector_store %arg8[%c0_63, %c56], %32 {strides = array<i32>} : memref<256x72xf32, #tpu.memory_space<vmem>>, vector<256x8xf32>,
    %c0_64 = arith.constant 0 : index
    %c2_65 = arith.constant 2 : index
    %c2_66 = arith.constant 2 : index
    %c0_67 = arith.constant 0 : index
    %34 = vector.load %arg7[%c0_64, %c2_65, %c2_66, %c0_67] : memref<1x18x18x8xf32, #tpu.memory_space<vmem>>, vector<1x16x16x8xf32>
    %35 = vector.shape_cast %34 : vector<1x16x16x8xf32> to vector<256x8xf32>
    %c0_68 = arith.constant 0 : index
    %c64 = arith.constant 64 : index
    %36 = vector.load %arg8[%c0_68, %c64] : memref<256x72xf32, #tpu.memory_space<vmem>>, vector<256x8xf32>
    tpu.vector_store %arg8[%c0_68, %c64], %35 {strides = array<i32>} : memref<256x72xf32, #tpu.memory_space<vmem>>, vector<256x8xf32>,
    %c0_69 = arith.constant 0 : index
    %c0_70 = arith.constant 0 : index
    %37 = vector.load %arg8[%c0_69, %c0_70] : memref<256x72xf32, #tpu.memory_space<vmem>>, vector<256x72xf32>
    %c0_71 = arith.constant 0 : index
    %c0_72 = arith.constant 0 : index
    %38 = vector.load %arg2[%c0_71, %c0_72] : memref<72x24xf32, #tpu.memory_space<vmem>>, vector<72x24xf32>
    %cst_73 = arith.constant dense<0.000000e+00> : vector<256x24xf32>
    %39 = tpu.matmul %37, %38, %cst_73 {dimension_numbers = #tpu.dot_dimension_numbers<[1], [0], [0], [1], [0, 0, 1, 1], [], []>} : vector<256x72xf32>, vector<72x24xf32>, vector<256x24xf32> -> vector<256x24xf32>
    %c0_74 = arith.constant 0 : index
    %c0_75 = arith.constant 0 : index
    %40 = vector.load %arg3[%c0_74, %c0_75] : memref<1x24xf32, #tpu.memory_space<vmem>>, vector<1x24xf32>
    %41 = vector.broadcast %40 : vector<1x24xf32> to vector<256x24xf32>
    %42 = arith.addf %39, %41 : vector<256x24xf32>
    %cst_76 = arith.constant 3.906250e-03 : f32
    %43 = vector.broadcast %cst_76 : f32 to vector<1x256xf32>
    %44 = vector.extract_strided_slice %42 {offsets = [0, 0], sizes = [256, 8], strides = [1, 1]} : vector<256x24xf32> to vector<256x8xf32>
    %45 = vector.extract_strided_slice %42 {offsets = [0, 8], sizes = [256, 8], strides = [1, 1]} : vector<256x24xf32> to vector<256x8xf32>
    %46 = vector.extract_strided_slice %42 {offsets = [0, 16], sizes = [256, 8], strides = [1, 1]} : vector<256x24xf32> to vector<256x8xf32>
    %cst_77 = arith.constant dense<0.000000e+00> : vector<1x8xf32>
    %47 = tpu.matmul %43, %44, %cst_77 {dimension_numbers = #tpu.dot_dimension_numbers<[1], [0], [0], [1], [0, 0, 1, 1], [], []>} : vector<1x256xf32>, vector<256x8xf32>, vector<1x8xf32> -> vector<1x8xf32>
    "tpu.trace_start"() <{level = 10 : i32, message = "qc,lc->ql"}> : () -> ()
    %cst_78 = arith.constant dense<0.000000e+00> : vector<1x256xf32>
    %48 = tpu.matmul %47, %45, %cst_78 {dimension_numbers = #tpu.dot_dimension_numbers<[1], [1], [0], [0], [0, 0, 1, 0], [], []>} : vector<1x8xf32>, vector<256x8xf32>, vector<1x256xf32> -> vector<1x256xf32>
    "tpu.trace_stop"() : () -> ()
    %cst_79 = arith.constant dense<0xFF800000> : vector<1xf32>
    %49 = vector.multi_reduction <maximumf>, %48, %cst_79 [1] : vector<1x256xf32> to vector<1xf32>
    %50 = vector.shape_cast %49 : vector<1xf32> to vector<1x1xf32>
    %51 = vector.broadcast %50 : vector<1x1xf32> to vector<1x256xf32>
    %52 = arith.subf %48, %51 : vector<1x256xf32>
    %53 = math.exp %52 : vector<1x256xf32>
    %cst_80 = arith.constant dense<0.000000e+00> : vector<1xf32>
    %54 = vector.multi_reduction <add>, %53, %cst_80 [1] : vector<1x256xf32> to vector<1xf32>
    %55 = vector.shape_cast %54 : vector<1xf32> to vector<1x1xf32>
    %56 = tpu.reciprocal %55 {approx = true} : vector<1x1xf32> -> vector<1x1xf32>
    %57 = vector.broadcast %56 : vector<1x1xf32> to vector<1x256xf32>
    %58 = arith.mulf %53, %57 : vector<1x256xf32>
    %cst_81 = arith.constant dense<0.000000e+00> : vector<1x8xf32>
    %59 = tpu.matmul %58, %46, %cst_81 {dimension_numbers = #tpu.dot_dimension_numbers<[1], [0], [0], [1], [0, 0, 1, 1], [], []>} : vector<1x256xf32>, vector<256x8xf32>, vector<1x8xf32> -> vector<1x8xf32>
    %c0_82 = arith.constant 0 : index
    %c0_83 = arith.constant 0 : index
    %60 = vector.load %arg4[%c0_82, %c0_83] : memref<1x8xf32, #tpu.memory_space<vmem>>, vector<1x8xf32>
    %61 = arith.mulf %59, %60 : vector<1x8xf32>
    %cst_84 = arith.constant dense<0.000000e+00> : vector<1xf32>
    %62 = vector.multi_reduction <add>, %61, %cst_84 [1] : vector<1x8xf32> to vector<1xf32>
    %63 = vector.shape_cast %62 : vector<1xf32> to vector<1x1xf32>
    %c0_85 = arith.constant 0 : index
    %c0_86 = arith.constant 0 : index
    %64 = vector.load %arg5[%c0_85, %c0_86] : memref<1x1xf32, #tpu.memory_space<vmem>>, vector<1x1xf32>
    %65 = arith.addf %63, %64 : vector<1x1xf32>
    %c0_87 = arith.constant 0 : index
    %c0_88 = arith.constant 0 : index
    %c0_89 = arith.constant 0 : index
    %c0_90 = arith.constant 0 : index
    %66 = vector.load %arg1[%c0_87, %c0_88, %c0_89, %c0_90] : memref<1x16x16x8xf32, #tpu.memory_space<vmem>>, vector<1x16x16x8xf32>
    %67 = vector.shape_cast %66 : vector<1x16x16x8xf32> to vector<16x16x8xf32>
    %68 = vector.shape_cast %65 : vector<1x1xf32> to vector<1x1x1xf32>
    %69 = vector.broadcast %68 : vector<1x1x1xf32> to vector<16x16x8xf32>
    %70 = arith.addf %67, %69 : vector<16x16x8xf32>
    %c0_91 = arith.constant 0 : index
    %c0_92 = arith.constant 0 : index
    %c0_93 = arith.constant 0 : index
    %c0_94 = arith.constant 0 : index
    %71 = vector.load %arg6[%c0_91, %c0_92, %c0_93, %c0_94] : memref<1x16x16x8xf32, #tpu.memory_space<vmem>>, vector<1x16x16x8xf32>
    %72 = vector.shape_cast %71 : vector<1x16x16x8xf32> to vector<16x16x8xf32>
    %73 = vector.shape_cast %70 : vector<16x16x8xf32> to vector<1x16x16x8xf32>
    tpu.vector_store %arg6[%c0_91, %c0_92, %c0_93, %c0_94], %73 {strides = array<i32>} : memref<1x16x16x8xf32, #tpu.memory_space<vmem>>, vector<1x16x16x8xf32>,
    return
  }
  func.func @transform_0(%arg0: i32) -> (i32, i32, i32, i32) {
    %c0_i32 = arith.constant 0 : i32
    %c0_i32_0 = arith.constant 0 : i32
    %c0_i32_1 = arith.constant 0 : i32
    %c0_i32_2 = arith.constant 0 : i32
    return %arg0, %c0_i32, %c0_i32_0, %c0_i32_1 : i32, i32, i32, i32
  }
  func.func @transform_1(%arg0: i32) -> (i32, i32) {
    %c0_i32 = arith.constant 0 : i32
    %c0_i32_0 = arith.constant 0 : i32
    %c0_i32_1 = arith.constant 0 : i32
    return %c0_i32, %c0_i32_0 : i32, i32
  }
  func.func @transform_2(%arg0: i32) -> (i32, i32) {
    %c0_i32 = arith.constant 0 : i32
    %c0_i32_0 = arith.constant 0 : i32
    %c0_i32_1 = arith.constant 0 : i32
    return %c0_i32, %c0_i32_0 : i32, i32
  }
  func.func @transform_3(%arg0: i32) -> (i32, i32) {
    %c0_i32 = arith.constant 0 : i32
    %c0_i32_0 = arith.constant 0 : i32
    %c0_i32_1 = arith.constant 0 : i32
    return %c0_i32, %c0_i32_0 : i32, i32
  }
  func.func @transform_4(%arg0: i32) -> (i32, i32) {
    %c0_i32 = arith.constant 0 : i32
    %c0_i32_0 = arith.constant 0 : i32
    %c0_i32_1 = arith.constant 0 : i32
    return %c0_i32, %c0_i32_0 : i32, i32
  }
  func.func @transform_5(%arg0: i32) -> (i32, i32, i32, i32) {
    %c0_i32 = arith.constant 0 : i32
    %c0_i32_0 = arith.constant 0 : i32
    %c0_i32_1 = arith.constant 0 : i32
    %c0_i32_2 = arith.constant 0 : i32
    return %arg0, %c0_i32, %c0_i32_0, %c0_i32_1 : i32, i32, i32, i32
  }
}

</mosaic_0001>

<llo_original>
// kernel: tpu_custom_call.1
$region0: #{tpu_custom_call.1}
  #allocation0 [shape = 'u32[]', space=smem, size = 0x4, offset = 0x4, fixed_abs, tag = 'smem constant byte address 0x4 - core index']
  #allocation1 [shape = 'u32[72,128]{1,0:T(1,128)}', space=vmem, size = 0x9000, scoped, tag = 'internal scratch']
  #allocation2 [shape = 'f32[1,18,18,8]{3,2,1,0:T(8,128)}', space=vmem, size = 0x36000, scoped, tag = 'scratch operand']
  #allocation3 [shape = 'f32[256,72]{1,0:T(8,128)}', space=vmem, size = 0x20000, scoped, tag = 'scratch operand']
  #allocation4 [shape = 'f32[1,1]{1,0:T(1,128)S(1)}', space=vmem, size = 0x200, scoped, tag = 'scoped memory for tpu_custom_call.1']
  %s0 = inlined_call_operand.vmem [shape: f32[2,16,16,8], index: 0, kind: input, shape index: {}]
  %s1 = inlined_call_operand.vmem [shape: f32[72,24], index: 1, kind: input, shape index: {}]
  %s2 = inlined_call_operand.vmem [shape: f32[1,24], index: 2, kind: input, shape index: {}]
  %s3 = inlined_call_operand.vmem [shape: f32[1,8], index: 3, kind: input, shape index: {}]
  %s4 = inlined_call_operand.<no memory space> [shape: f32[1,1], index: 4, kind: input, shape index: {}]
  %s5 = inlined_call_operand.vmem [shape: f32[2,16,16,8], index: 5, kind: output, shape index: {}]
  %s6 = sld [smem:[#allocation0]]
  $region53: #{tpu_custom_call.1} parent=0
    _
  %s8 = ssub.s32 1, %s6
  %s9 = scalar_select 0, %s8, %s6
  %v10 = vstv %s4
  %11 = vst [vmem:[#allocation4] sm:$0x1] %v10
  loop: start=0, step=1, limit=4
  $region2: #{tpu_custom_call.1} parent=0 // loop_pre_header
    _
  $region3: #{tpu_custom_call.1} parent=0 // loop_header
    %s13 = sphi 0, %s17
    %p14 = scmp.ge.s32.totalorder %s13, 4
    %s23 = sphi 0, %s25
    %s26 = sphi 0, %s23
    %s27 = sphi 0, %s26
    %s43 = sphi 0, %s27
    %s47 = sphi 0, %s47
    %s49 = sphi 0, %s47
    %s50 = sphi 0, %s49
    %s64 = sphi 0, %s50
    %s68 = sphi 0, %s68
    %s70 = sphi 0, %s68
    %s71 = sphi 0, %s70
    %s85 = sphi 0, %s71
    %s89 = sphi 0, %s89
    %s91 = sphi 0, %s89
    %s92 = sphi 0, %s91
    %s106 = sphi 0, %s92
    %s110 = sphi 0, %s110
    %s112 = sphi 0, %s110
    %s113 = sphi 0, %s112
    %s127 = sphi 0, %s113
    %s133 = sphi 0, %s135
    %s136 = sphi 0, %s133
    %s137 = sphi 0, %s136
    %s153 = sphi 0, %s137
  $region4: #{tpu_custom_call.1} parent=0 // loop_header_branch
    %16 = sbr.rel (%p14) target = $region8
  $region5: #{tpu_custom_call.1} parent=0 // loop_body
    %s18 = ssub.s32 %s13, 1
    %s19 = ssub.s32 %s13, 2
    %s20 = sadd.s32 %s13, 1
    %s21 = ssub.s32 %s13, %s20
    %p22 = scmp.eq.s32.totalorder %s21, 0
    %s24 = sadd.s32 %s23, 1
    %s25 = scalar_select %p22, %s23, %s24
    %p28 = pneg %p22
    %p29 = scmp.eq.s32.totalorder %s13, 1
    %p30 = por %p28, %p29
    %p31 = scmp.ne.s32.totalorder %s23, %s26
    %p32 = scmp.eq.s32.totalorder %s13, 0
    %p33 = por %p31, %p32
    %p34 = scmp.ne.s32.totalorder %s23, %s26
    %p35 = scmp.eq.s32.totalorder %s18, 1
    %p36 = por %p34, %p35
    %p37 = scmp.ne.s32.totalorder %s26, %s27
    %p38 = scmp.eq.s32.totalorder %s18, 0
    %p39 = por %p37, %p38
    %p40 = scmp.ne.s32.totalorder %s26, %s27
    %p41 = scmp.eq.s32.totalorder %s19, 1
    %p42 = por %p40, %p41
    %p44 = scmp.ne.s32.totalorder %s27, %s43
    %p45 = scmp.eq.s32.totalorder %s19, 0
    %p46 = por %p44, %p45
    %s48 = sadd.s32 %s47, 1
    %p51 = scmp.eq.s32.totalorder %s13, 1
    %p52 = scmp.ne.s32.totalorder %s47, %s49
    %p53 = scmp.eq.s32.totalorder %s13, 0
    %p54 = por %p52, %p53
    %p55 = scmp.ne.s32.totalorder %s47, %s49
    %p56 = scmp.eq.s32.totalorder %s18, 1
    %p57 = por %p55, %p56
    %p58 = scmp.ne.s32.totalorder %s49, %s50
    %p59 = scmp.eq.s32.totalorder %s18, 0
    %p60 = por %p58, %p59
    %p61 = scmp.ne.s32.totalorder %s49, %s50
    %p62 = scmp.eq.s32.totalorder %s19, 1
    %p63 = por %p61, %p62
    %p65 = scmp.ne.s32.totalorder %s50, %s64
    %p66 = scmp.eq.s32.totalorder %s19, 0
    %p67 = por %p65, %p66
    %s69 = sadd.s32 %s68, 1
    %p72 = scmp.eq.s32.totalorder %s13, 1
    %p73 = scmp.ne.s32.totalorder %s68, %s70
    %p74 = scmp.eq.s32.totalorder %s13, 0
    %p75 = por %p73, %p74
    %p76 = scmp.ne.s32.totalorder %s68, %s70
    %p77 = scmp.eq.s32.totalorder %s18, 1
    %p78 = por %p76, %p77
    %p79 = scmp.ne.s32.totalorder %s70, %s71
    %p80 = scmp.eq.s32.totalorder %s18, 0
    %p81 = por %p79, %p80
    %p82 = scmp.ne.s32.totalorder %s70, %s71
    %p83 = scmp.eq.s32.totalorder %s19, 1
    %p84 = por %p82, %p83
    %p86 = scmp.ne.s32.totalorder %s71, %s85
    %p87 = scmp.eq.s32.totalorder %s19, 0
    %p88 = por %p86, %p87
    %s90 = sadd.s32 %s89, 1
    %p93 = scmp.eq.s32.totalorder %s13, 1
    %p94 = scmp.ne.s32.totalorder %s89, %s91
    %p95 = scmp.eq.s32.totalorder %s13, 0
    %p96 = por %p94, %p95
    %p97 = scmp.ne.s32.totalorder %s89, %s91
    %p98 = scmp.eq.s32.totalorder %s18, 1
    %p99 = por %p97, %p98
    %p100 = scmp.ne.s32.totalorder %s91, %s92
    %p101 = scmp.eq.s32.totalorder %s18, 0
    %p102 = por %p100, %p101
    %p103 = scmp.ne.s32.totalorder %s91, %s92
    %p104 = scmp.eq.s32.totalorder %s19, 1
    %p105 = por %p103, %p104
    %p107 = scmp.ne.s32.totalorder %s92, %s106
    %p108 = scmp.eq.s32.totalorder %s19, 0
    %p109 = por %p107, %p108
    %s111 = sadd.s32 %s110, 1
    %p114 = scmp.eq.s32.totalorder %s13, 1
    %p115 = scmp.ne.s32.totalorder %s110, %s112
    %p116 = scmp.eq.s32.totalorder %s13, 0
    %p117 = por %p115, %p116
    %p118 = scmp.ne.s32.totalorder %s110, %s112
    %p119 = scmp.eq.s32.totalorder %s18, 1
    %p120 = por %p118, %p119
    %p121 = scmp.ne.s32.totalorder %s112, %s113
    %p122 = scmp.eq.s32.totalorder %s18, 0
    %p123 = por %p121, %p122
    %p124 = scmp.ne.s32.totalorder %s112, %s113
    %p125 = scmp.eq.s32.totalorder %s19, 1
    %p126 = por %p124, %p125
    %p128 = scmp.ne.s32.totalorder %s113, %s127
    %p129 = scmp.eq.s32.totalorder %s19, 0
    %p130 = por %p128, %p129
    %s131 = ssub.s32 %s13, %s20
    %p132 = scmp.eq.s32.totalorder %s131, 0
    %s134 = sadd.s32 %s133, 1
    %s135 = scalar_select %p132, %s133, %s134
    %p138 = pneg %p132
    %p139 = scmp.eq.s32.totalorder %s13, 1
    %p140 = por %p138, %p139
    %p141 = scmp.ne.s32.totalorder %s133, %s136
    %p142 = scmp.eq.s32.totalorder %s13, 0
    %p143 = por %p141, %p142
    %p144 = scmp.ne.s32.totalorder %s133, %s136
    %p145 = scmp.eq.s32.totalorder %s18, 1
    %p146 = por %p144, %p145
    %p147 = scmp.ne.s32.totalorder %s136, %s137
    %p148 = scmp.eq.s32.totalorder %s18, 0
    %p149 = por %p147, %p148
    %p150 = scmp.ne.s32.totalorder %s136, %s137
    %p151 = scmp.eq.s32.totalorder %s19, 1
    %p152 = por %p150, %p151
    %p154 = scmp.ne.s32.totalorder %s137, %s153
    %p155 = scmp.eq.s32.totalorder %s19, 0
    %p156 = por %p154, %p155
    %p157 = scmp.le.s32.totalorder 1, %s13
    %p158 = scmp.lt.s32.totalorder %s13, 3
    %p159 = pnand %p157, %p158
    %p160 = pneg %p159
    // Predicated region
    $region9: #{tpu_custom_call.1} parent=5 // pred_check
      _
    $region10: #{tpu_custom_call.1} parent=5 // pred_check_branch
      %162 = sbr.rel (%p159) target = $region12
    $region11: #{tpu_custom_call.1} parent=5 // pred_region
      %s163 = ssub.s32 %s13, 1
      // Predicated region
      $region13: #{tpu_custom_call.1} parent=11 // pred_check
        %p164 = pneg %p60
      $region14: #{tpu_custom_call.1} parent=11 // pred_check_branch
        %166 = sbr.rel (%p164) target = $region16
      $region15: #{tpu_custom_call.1} parent=11 // pred_region
        _
      $region16: #{tpu_custom_call.1} parent=11 // pred_fallthru
        _
      // Predicated region
      $region17: #{tpu_custom_call.1} parent=11 // pred_check
        %p167 = pneg %p81
      $region18: #{tpu_custom_call.1} parent=11 // pred_check_branch
        %169 = sbr.rel (%p167) target = $region20
      $region19: #{tpu_custom_call.1} parent=11 // pred_region
        _
      $region20: #{tpu_custom_call.1} parent=11 // pred_fallthru
        _
      // Predicated region
      $region21: #{tpu_custom_call.1} parent=11 // pred_check
        %p170 = pneg %p102
      $region22: #{tpu_custom_call.1} parent=11 // pred_check_branch
        %172 = sbr.rel (%p170) target = $region24
      $region23: #{tpu_custom_call.1} parent=11 // pred_region
        _
      $region24: #{tpu_custom_call.1} parent=11 // pred_fallthru
        _
      // Predicated region
      $region25: #{tpu_custom_call.1} parent=11 // pred_check
        %p173 = pneg %p123
      $region26: #{tpu_custom_call.1} parent=11 // pred_check_branch
        %175 = sbr.rel (%p173) target = $region28
      $region27: #{tpu_custom_call.1} parent=11 // pred_region
        _
      $region28: #{tpu_custom_call.1} parent=11 // pred_fallthru
        _
    $region12: #{tpu_custom_call.1} parent=5 // pred_fallthru
      _
    %p176 = scmp.lt.s32.totalorder %s13, 2
    // Predicated region
    $region29: #{tpu_custom_call.1} parent=5 // pred_check
      %p177 = pneg %p176
    $region30: #{tpu_custom_call.1} parent=5 // pred_check_branch
      %179 = sbr.rel (%p177) target = $region32
    $region31: #{tpu_custom_call.1} parent=5 // pred_region
      // Predicated region
      $region33: #{tpu_custom_call.1} parent=31 // pred_check
        %p180 = pneg %p33
      $region34: #{tpu_custom_call.1} parent=31 // pred_check_branch
        %182 = sbr.rel (%p180) target = $region36
      $region35: #{tpu_custom_call.1} parent=31 // pred_region
        %p183 = scmp.lt.s32.totalorder %s13, 1
        %s184 = scalar_select %p183, %s13, 1
        %s185 = smul.addr %s184, 32
        %s186 = smul.addr %s185, 8
        %s187 = scalar_lea.vmem %s0, %s186
      $region36: #{tpu_custom_call.1} parent=31 // pred_fallthru
        _
    $region32: #{tpu_custom_call.1} parent=5 // pred_fallthru
      _
    %p188 = scmp.le.s32.totalorder 1, %s13
    %p189 = scmp.lt.s32.totalorder %s13, 3
    %p190 = pnand %p188, %p189
    %p191 = pneg %p190
    // Predicated region
    $region37: #{tpu_custom_call.1} parent=5 // pred_check
      _
    $region38: #{tpu_custom_call.1} parent=5 // pred_check_branch
      %193 = sbr.rel (%p190) target = $region40
    $region39: #{tpu_custom_call.1} parent=5 // pred_region
      %s194 = ssub.s32 %s13, 1
      %p195 = scmp.lt.s32.totalorder %s18, 1
      %s196 = scalar_select %p195, %s18, 1
      %s197 = smul.addr %s196, 32
      %s198 = smul.addr %s197, 8
      %s199 = scalar_lea.vmem %s0, %s198
      %p200 = pneg %p39
      %p201 = pneg %p36
      %p202 = pneg %p60
      %p203 = pneg %p57
      %p204 = pneg %p81
      %p205 = pneg %p78
      %p206 = pneg %p102
      %p207 = pneg %p99
      %p208 = pneg %p123
      %p209 = pneg %p120
      %p210 = pneg %p149
      %p211 = pneg %p146
      %p212 = scmp.lt.s32.totalorder %s18, 1
      %s213 = scalar_select %p212, %s18, 1
      %s214 = smul.addr %s213, 32
      %s215 = smul.addr %s214, 8
      %s216 = scalar_lea.vmem %s5, %s215
      %p217 = scmp.lt.s32.totalorder %s18, 1
      %s218 = scalar_select %p217, %s18, 1
      %s219 = smul.addr %s218, 32
      %s220 = smul.addr %s219, 8
      %s221 = scalar_lea.vmem %s0, %s220
      %p222 = scmp.lt.s32.totalorder %s18, 1
      %s223 = scalar_select %p222, %s18, 1
      %s224 = smul.addr %s223, 32
      %s225 = smul.addr %s224, 8
      %s226 = scalar_lea.vmem %s5, %s225
      %vm227 = vcmask 64512
      %228 = vst.msk [vmem:[#allocation2] sm:$0xff] %vm227, 0.0
      %229 = vst.msk [vmem:[#allocation2 + $0x8] sm:$0xff] %vm227, 0.0
      %vm230 = vcmask 58368
      %231 = vst.msk [vmem:[#allocation2 + $0x10] sm:$0x3] %vm230, 0.0
      %s232 = scalar_lea.vmem [#allocation2], 408
      %233 = vst.msk [vmem:[%s232] sm:$0xff] %vm227, 0.0
      %234 = vst.msk [vmem:[%s232 + $0x8] sm:$0xff] %vm227, 0.0
      %235 = vst.msk [vmem:[%s232 + $0x10] sm:$0x3] %vm230, 0.0
      %vm236 = vcmask 57344
      %237 = vst.msk [vmem:[#allocation2] sm:$0x1] %vm236, 0.0
      %238 = vst.msk [vmem:[#allocation2 + $0x18] sm:$0x1] %vm236, 0.0
      %239 = vst.msk [vmem:[#allocation2 + $0x30] sm:$0x1] %vm236, 0.0
      %240 = vst.msk [vmem:[#allocation2 + $0x48] sm:$0x1] %vm236, 0.0
      %241 = vst.msk [vmem:[#allocation2 + $0x60] sm:$0x1] %vm236, 0.0
      %242 = vst.msk [vmem:[#allocation2 + $0x78] sm:$0x1] %vm236, 0.0
      %243 = vst.msk [vmem:[#allocation2 + $0x90] sm:$0x1] %vm236, 0.0
      %244 = vst.msk [vmem:[#allocation2 + $0xa8] sm:$0x1] %vm236, 0.0
      %245 = vst.msk [vmem:[#allocation2 + $0xc0] sm:$0x1] %vm236, 0.0
      %246 = vst.msk [vmem:[#allocation2 + $0xd8] sm:$0x1] %vm236, 0.0
      %247 = vst.msk [vmem:[#allocation2 + $0xf0] sm:$0x1] %vm236, 0.0
      %248 = vst.msk [vmem:[#allocation2 + $0x108] sm:$0x1] %vm236, 0.0
      %249 = vst.msk [vmem:[#allocation2 + $0x120] sm:$0x1] %vm236, 0.0
      %250 = vst.msk [vmem:[#allocation2 + $0x138] sm:$0x1] %vm236, 0.0
      %251 = vst.msk [vmem:[#allocation2 + $0x150] sm:$0x1] %vm236, 0.0
      %252 = vst.msk [vmem:[#allocation2 + $0x168] sm:$0x1] %vm236, 0.0
      %253 = vst.msk [vmem:[#allocation2 + $0x180] sm:$0x1] %vm236, 0.0
      %254 = vst.msk [vmem:[#allocation2 + $0x198] sm:$0x1] %vm236, 0.0
      %255 = vst.msk [vmem:[#allocation2 + $0x11] sm:$0x1] %vm236, 0.0
      %256 = vst.msk [vmem:[#allocation2 + $0x29] sm:$0x1] %vm236, 0.0
      %257 = vst.msk [vmem:[#allocation2 + $0x41] sm:$0x1] %vm236, 0.0
      %258 = vst.msk [vmem:[#allocation2 + $0x59] sm:$0x1] %vm236, 0.0
      %259 = vst.msk [vmem:[#allocation2 + $0x71] sm:$0x1] %vm236, 0.0
      %260 = vst.msk [vmem:[#allocation2 + $0x89] sm:$0x1] %vm236, 0.0
      %261 = vst.msk [vmem:[#allocation2 + $0xa1] sm:$0x1] %vm236, 0.0
      %262 = vst.msk [vmem:[#allocation2 + $0xb9] sm:$0x1] %vm236, 0.0
      %263 = vst.msk [vmem:[#allocation2 + $0xd1] sm:$0x1] %vm236, 0.0
      %264 = vst.msk [vmem:[#allocation2 + $0xe9] sm:$0x1] %vm236, 0.0
      %265 = vst.msk [vmem:[#allocation2 + $0x101] sm:$0x1] %vm236, 0.0
      %266 = vst.msk [vmem:[#allocation2 + $0x119] sm:$0x1] %vm236, 0.0
      %267 = vst.msk [vmem:[#allocation2 + $0x131] sm:$0x1] %vm236, 0.0
      %268 = vst.msk [vmem:[#allocation2 + $0x149] sm:$0x1] %vm236, 0.0
      %269 = vst.msk [vmem:[#allocation2 + $0x161] sm:$0x1] %vm236, 0.0
      %270 = vst.msk [vmem:[#allocation2 + $0x179] sm:$0x1] %vm236, 0.0
      %271 = vst.msk [vmem:[#allocation2 + $0x191] sm:$0x1] %vm236, 0.0
      %272 = vst.msk [vmem:[#allocation2 + $0x1a9] sm:$0x1] %vm236, 0.0
      %v273 = vld [vmem:[%s221] sm:$0xff]
      %v274 = vld [vmem:[%s221 + $0x8] sm:$0xff]
      %v275 = vld [vmem:[%s221 + $0x10] sm:$0xff]
      %v276 = vld [vmem:[%s221 + $0x18] sm:$0xff]
      %v277 = vld [vmem:[%s221 + $0x20] sm:$0xff]
      %v278 = vld [vmem:[%s221 + $0x28] sm:$0xff]
      %v279 = vld [vmem:[%s221 + $0x30] sm:$0xff]
      %v280 = vld [vmem:[%s221 + $0x38] sm:$0xff]
      %v281 = vld [vmem:[%s221 + $0x40] sm:$0xff]
      %v282 = vld [vmem:[%s221 + $0x48] sm:$0xff]
      %v283 = vld [vmem:[%s221 + $0x50] sm:$0xff]
      %v284 = vld [vmem:[%s221 + $0x58] sm:$0xff]
      %v285 = vld [vmem:[%s221 + $0x60] sm:$0xff]
      %v286 = vld [vmem:[%s221 + $0x68] sm:$0xff]
      %v287 = vld [vmem:[%s221 + $0x70] sm:$0xff]
      %v288 = vld [vmem:[%s221 + $0x78] sm:$0xff]
      %v289 = vld [vmem:[%s221 + $0x80] sm:$0xff]
      %v290 = vld [vmem:[%s221 + $0x88] sm:$0xff]
      %v291 = vld [vmem:[%s221 + $0x90] sm:$0xff]
      %v292 = vld [vmem:[%s221 + $0x98] sm:$0xff]
      %v293 = vld [vmem:[%s221 + $0xa0] sm:$0xff]
      %v294 = vld [vmem:[%s221 + $0xa8] sm:$0xff]
      %v295 = vld [vmem:[%s221 + $0xb0] sm:$0xff]
      %v296 = vld [vmem:[%s221 + $0xb8] sm:$0xff]
      %v297 = vld [vmem:[%s221 + $0xc0] sm:$0xff]
      %v298 = vld [vmem:[%s221 + $0xc8] sm:$0xff]
      %v299 = vld [vmem:[%s221 + $0xd0] sm:$0xff]
      %v300 = vld [vmem:[%s221 + $0xd8] sm:$0xff]
      %v301 = vld [vmem:[%s221 + $0xe0] sm:$0xff]
      %v302 = vld [vmem:[%s221 + $0xe8] sm:$0xff]
      %v303 = vld [vmem:[%s221 + $0xf0] sm:$0xff]
      %v304 = vld [vmem:[%s221 + $0xf8] sm:$0xff]
      %s305 = scalar_lea.vmem [#allocation2], 24
      %306 = vst.msk [vmem:[%s305 + $0x1] sm:$0xff] %vm227, %v273
      %307 = vst.msk [vmem:[%s305 + $0x9] sm:$0xff] %vm227, %v274
      %308 = vst.msk [vmem:[%s305 + $0x19] sm:$0xff] %vm227, %v275
      %309 = vst.msk [vmem:[%s305 + $0x21] sm:$0xff] %vm227, %v276
      %310 = vst.msk [vmem:[%s305 + $0x31] sm:$0xff] %vm227, %v277
      %311 = vst.msk [vmem:[%s305 + $0x39] sm:$0xff] %vm227, %v278
      %312 = vst.msk [vmem:[%s305 + $0x49] sm:$0xff] %vm227, %v279
      %313 = vst.msk [vmem:[%s305 + $0x51] sm:$0xff] %vm227, %v280
      %314 = vst.msk [vmem:[%s305 + $0x61] sm:$0xff] %vm227, %v281
      %315 = vst.msk [vmem:[%s305 + $0x69] sm:$0xff] %vm227, %v282
      %316 = vst.msk [vmem:[%s305 + $0x79] sm:$0xff] %vm227, %v283
      %317 = vst.msk [vmem:[%s305 + $0x81] sm:$0xff] %vm227, %v284
      %318 = vst.msk [vmem:[%s305 + $0x91] sm:$0xff] %vm227, %v285
      %319 = vst.msk [vmem:[%s305 + $0x99] sm:$0xff] %vm227, %v286
      %320 = vst.msk [vmem:[%s305 + $0xa9] sm:$0xff] %vm227, %v287
      %321 = vst.msk [vmem:[%s305 + $0xb1] sm:$0xff] %vm227, %v288
      %322 = vst.msk [vmem:[%s305 + $0xc1] sm:$0xff] %vm227, %v289
      %323 = vst.msk [vmem:[%s305 + $0xc9] sm:$0xff] %vm227, %v290
      %324 = vst.msk [vmem:[%s305 + $0xd9] sm:$0xff] %vm227, %v291
      %325 = vst.msk [vmem:[%s305 + $0xe1] sm:$0xff] %vm227, %v292
      %326 = vst.msk [vmem:[%s305 + $0xf1] sm:$0xff] %vm227, %v293
      %327 = vst.msk [vmem:[%s305 + $0xf9] sm:$0xff] %vm227, %v294
      %328 = vst.msk [vmem:[%s305 + $0x109] sm:$0xff] %vm227, %v295
      %329 = vst.msk [vmem:[%s305 + $0x111] sm:$0xff] %vm227, %v296
      %330 = vst.msk [vmem:[%s305 + $0x121] sm:$0xff] %vm227, %v297
      %331 = vst.msk [vmem:[%s305 + $0x129] sm:$0xff] %vm227, %v298
      %332 = vst.msk [vmem:[%s305 + $0x139] sm:$0xff] %vm227, %v299
      %333 = vst.msk [vmem:[%s305 + $0x141] sm:$0xff] %vm227, %v300
      %334 = vst.msk [vmem:[%s305 + $0x151] sm:$0xff] %vm227, %v301
      %335 = vst.msk [vmem:[%s305 + $0x159] sm:$0xff] %vm227, %v302
      %336 = vst.msk [vmem:[%s305 + $0x169] sm:$0xff] %vm227, %v303
      %337 = vst.msk [vmem:[%s305 + $0x171] sm:$0xff] %vm227, %v304
      %v338 = vld [vmem:[#allocation2] sm:$0xff]
      %v339 = vld [vmem:[#allocation2 + $0x8] sm:$0xff]
      %v340 = vld [vmem:[#allocation2 + $0x18] sm:$0xff]
      %v341 = vld [vmem:[#allocation2 + $0x20] sm:$0xff]
      %v342 = vld [vmem:[#allocation2 + $0x30] sm:$0xff]
      %v343 = vld [vmem:[#allocation2 + $0x38] sm:$0xff]
      %v344 = vld [vmem:[#allocation2 + $0x48] sm:$0xff]
      %v345 = vld [vmem:[#allocation2 + $0x50] sm:$0xff]
      %v346 = vld [vmem:[#allocation2 + $0x60] sm:$0xff]
      %v347 = vld [vmem:[#allocation2 + $0x68] sm:$0xff]
      %v348 = vld [vmem:[#allocation2 + $0x78] sm:$0xff]
      %v349 = vld [vmem:[#allocation2 + $0x80] sm:$0xff]
      %v350 = vld [vmem:[#allocation2 + $0x90] sm:$0xff]
      %v351 = vld [vmem:[#allocation2 + $0x98] sm:$0xff]
      %v352 = vld [vmem:[#allocation2 + $0xa8] sm:$0xff]
      %v353 = vld [vmem:[#allocation2 + $0xb0] sm:$0xff]
      %v354 = vld [vmem:[#allocation2 + $0xc0] sm:$0xff]
      %v355 = vld [vmem:[#allocation2 + $0xc8] sm:$0xff]
      %v356 = vld [vmem:[#allocation2 + $0xd8] sm:$0xff]
      %v357 = vld [vmem:[#allocation2 + $0xe0] sm:$0xff]
      %v358 = vld [vmem:[#allocation2 + $0xf0] sm:$0xff]
      %v359 = vld [vmem:[#allocation2 + $0xf8] sm:$0xff]
      %v360 = vld [vmem:[#allocation2 + $0x108] sm:$0xff]
      %v361 = vld [vmem:[#allocation2 + $0x110] sm:$0xff]
      %v362 = vld [vmem:[#allocation2 + $0x120] sm:$0xff]
      %v363 = vld [vmem:[#allocation2 + $0x128] sm:$0xff]
      %v364 = vld [vmem:[#allocation2 + $0x138] sm:$0xff]
      %v365 = vld [vmem:[#allocation2 + $0x140] sm:$0xff]
      %v366 = vld [vmem:[#allocation2 + $0x150] sm:$0xff]
      %v367 = vld [vmem:[#allocation2 + $0x158] sm:$0xff]
      %v368 = vld [vmem:[#allocation2 + $0x168] sm:$0xff]
      %v369 = vld [vmem:[#allocation2 + $0x170] sm:$0xff]
      %370 = vst.msk [vmem:[#allocation3] sm:$0xff] %vm227, %v338
      %371 = vst.msk [vmem:[#allocation3 + $0x8] sm:$0xff] %vm227, %v339
      %372 = vst.msk [vmem:[#allocation3 + $0x10] sm:$0xff] %vm227, %v340
      %373 = vst.msk [vmem:[#allocation3 + $0x18] sm:$0xff] %vm227, %v341
      %374 = vst.msk [vmem:[#allocation3 + $0x20] sm:$0xff] %vm227, %v342
      %375 = vst.msk [vmem:[#allocation3 + $0x28] sm:$0xff] %vm227, %v343
      %376 = vst.msk [vmem:[#allocation3 + $0x30] sm:$0xff] %vm227, %v344
      %377 = vst.msk [vmem:[#allocation3 + $0x38] sm:$0xff] %vm227, %v345
      %378 = vst.msk [vmem:[#allocation3 + $0x40] sm:$0xff] %vm227, %v346
      %379 = vst.msk [vmem:[#allocation3 + $0x48] sm:$0xff] %vm227, %v347
      %380 = vst.msk [vmem:[#allocation3 + $0x50] sm:$0xff] %vm227, %v348
      %381 = vst.msk [vmem:[#allocation3 + $0x58] sm:$0xff] %vm227, %v349
      %382 = vst.msk [vmem:[#allocation3 + $0x60] sm:$0xff] %vm227, %v350
      %383 = vst.msk [vmem:[#allocation3 + $0x68] sm:$0xff] %vm227, %v351
      %384 = vst.msk [vmem:[#allocation3 + $0x70] sm:$0xff] %vm227, %v352
      %385 = vst.msk [vmem:[#allocation3 + $0x78] sm:$0xff] %vm227, %v353
      %386 = vst.msk [vmem:[#allocation3 + $0x80] sm:$0xff] %vm227, %v354
      %387 = vst.msk [vmem:[#allocation3 + $0x88] sm:$0xff] %vm227, %v355
      %388 = vst.msk [vmem:[#allocation3 + $0x90] sm:$0xff] %vm227, %v356
      %389 = vst.msk [vmem:[#allocation3 + $0x98] sm:$0xff] %vm227, %v357
      %390 = vst.msk [vmem:[#allocation3 + $0xa0] sm:$0xff] %vm227, %v358
      %391 = vst.msk [vmem:[#allocation3 + $0xa8] sm:$0xff] %vm227, %v359
      %392 = vst.msk [vmem:[#allocation3 + $0xb0] sm:$0xff] %vm227, %v360
      %393 = vst.msk [vmem:[#allocation3 + $0xb8] sm:$0xff] %vm227, %v361
      %394 = vst.msk [vmem:[#allocation3 + $0xc0] sm:$0xff] %vm227, %v362
      %395 = vst.msk [vmem:[#allocation3 + $0xc8] sm:$0xff] %vm227, %v363
      %396 = vst.msk [vmem:[#allocation3 + $0xd0] sm:$0xff] %vm227, %v364
      %397 = vst.msk [vmem:[#allocation3 + $0xd8] sm:$0xff] %vm227, %v365
      %398 = vst.msk [vmem:[#allocation3 + $0xe0] sm:$0xff] %vm227, %v366
      %399 = vst.msk [vmem:[#allocation3 + $0xe8] sm:$0xff] %vm227, %v367
      %400 = vst.msk [vmem:[#allocation3 + $0xf0] sm:$0xff] %vm227, %v368
      %401 = vst.msk [vmem:[#allocation3 + $0xf8] sm:$0xff] %vm227, %v369
      %v402 = vld [vmem:[#allocation2 + $0x1] sm:$0xff]
      %v403 = vld [vmem:[#allocation2 + $0x9] sm:$0xff]
      %v404 = vld [vmem:[#allocation2 + $0x19] sm:$0xff]
      %v405 = vld [vmem:[#allocation2 + $0x21] sm:$0xff]
      %v406 = vld [vmem:[#allocation2 + $0x31] sm:$0xff]
      %v407 = vld [vmem:[#allocation2 + $0x39] sm:$0xff]
      %v408 = vld [vmem:[#allocation2 + $0x49] sm:$0xff]
      %v409 = vld [vmem:[#allocation2 + $0x51] sm:$0xff]
      %v410 = vld [vmem:[#allocation2 + $0x61] sm:$0xff]
      %v411 = vld [vmem:[#allocation2 + $0x69] sm:$0xff]
      %v412 = vld [vmem:[#allocation2 + $0x79] sm:$0xff]
      %v413 = vld [vmem:[#allocation2 + $0x81] sm:$0xff]
      %v414 = vld [vmem:[#allocation2 + $0x91] sm:$0xff]
      %v415 = vld [vmem:[#allocation2 + $0x99] sm:$0xff]
      %v416 = vld [vmem:[#allocation2 + $0xa9] sm:$0xff]
      %v417 = vld [vmem:[#allocation2 + $0xb1] sm:$0xff]
      %v418 = vld [vmem:[#allocation2 + $0xc1] sm:$0xff]
      %v419 = vld [vmem:[#allocation2 + $0xc9] sm:$0xff]
      %v420 = vld [vmem:[#allocation2 + $0xd9] sm:$0xff]
      %v421 = vld [vmem:[#allocation2 + $0xe1] sm:$0xff]
      %v422 = vld [vmem:[#allocation2 + $0xf1] sm:$0xff]
      %v423 = vld [vmem:[#allocation2 + $0xf9] sm:$0xff]
      %v424 = vld [vmem:[#allocation2 + $0x109] sm:$0xff]
      %v425 = vld [vmem:[#allocation2 + $0x111] sm:$0xff]
      %v426 = vld [vmem:[#allocation2 + $0x121] sm:$0xff]
      %v427 = vld [vmem:[#allocation2 + $0x129] sm:$0xff]
      %v428 = vld [vmem:[#allocation2 + $0x139] sm:$0xff]
      %v429 = vld [vmem:[#allocation2 + $0x141] sm:$0xff]
      %v430 = vld [vmem:[#allocation2 + $0x151] sm:$0xff]
      %v431 = vld [vmem:[#allocation2 + $0x159] sm:$0xff]
      %v432 = vld [vmem:[#allocation2 + $0x169] sm:$0xff]
      %v433 = vld [vmem:[#allocation2 + $0x171] sm:$0xff]
      %466 = vrot.lane.b32.xlu0 %v402, 8
      %v467 = vpop.permute.xlu0 %466
      %468 = vrot.lane.b32.xlu0 %v403, 8
      %v469 = vpop.permute.xlu0 %468
      %470 = vrot.lane.b32.xlu0 %v404, 8
      %v471 = vpop.permute.xlu0 %470
      %472 = vrot.lane.b32.xlu0 %v405, 8
      %v473 = vpop.permute.xlu0 %472
      %474 = vrot.lane.b32.xlu0 %v406, 8
      %v475 = vpop.permute.xlu0 %474
      %476 = vrot.lane.b32.xlu0 %v407, 8
      %v477 = vpop.permute.xlu0 %476
      %478 = vrot.lane.b32.xlu0 %v408, 8
      %v479 = vpop.permute.xlu0 %478
      %480 = vrot.lane.b32.xlu0 %v409, 8
      %v481 = vpop.permute.xlu0 %480
      %482 = vrot.lane.b32.xlu0 %v410, 8
      %v483 = vpop.permute.xlu0 %482
      %484 = vrot.lane.b32.xlu0 %v411, 8
      %v485 = vpop.permute.xlu0 %484
      %486 = vrot.lane.b32.xlu0 %v412, 8
      %v487 = vpop.permute.xlu0 %486
      %488 = vrot.lane.b32.xlu0 %v413, 8
      %v489 = vpop.permute.xlu0 %488
      %490 = vrot.lane.b32.xlu0 %v414, 8
      %v491 = vpop.permute.xlu0 %490
      %492 = vrot.lane.b32.xlu0 %v415, 8
      %v493 = vpop.permute.xlu0 %492
      %494 = vrot.lane.b32.xlu0 %v416, 8
      %v495 = vpop.permute.xlu0 %494
      %496 = vrot.lane.b32.xlu0 %v417, 8
      %v497 = vpop.permute.xlu0 %496
      %498 = vrot.lane.b32.xlu0 %v418, 8
      %v499 = vpop.permute.xlu0 %498
      %500 = vrot.lane.b32.xlu0 %v419, 8
      %v501 = vpop.permute.xlu0 %500
      %502 = vrot.lane.b32.xlu0 %v420, 8
      %v503 = vpop.permute.xlu0 %502
      %504 = vrot.lane.b32.xlu0 %v421, 8
      %v505 = vpop.permute.xlu0 %504
      %506 = vrot.lane.b32.xlu0 %v422, 8
      %v507 = vpop.permute.xlu0 %506
      %508 = vrot.lane.b32.xlu0 %v423, 8
      %v509 = vpop.permute.xlu0 %508
      %510 = vrot.lane.b32.xlu0 %v424, 8
      %v511 = vpop.permute.xlu0 %510
      %512 = vrot.lane.b32.xlu0 %v425, 8
      %v513 = vpop.permute.xlu0 %512
      %514 = vrot.lane.b32.xlu0 %v426, 8
      %v515 = vpop.permute.xlu0 %514
      %516 = vrot.lane.b32.xlu0 %v427, 8
      %v517 = vpop.permute.xlu0 %516
      %518 = vrot.lane.b32.xlu0 %v428, 8
      %v519 = vpop.permute.xlu0 %518
      %520 = vrot.lane.b32.xlu0 %v429, 8
      %v521 = vpop.permute.xlu0 %520
      %522 = vrot.lane.b32.xlu0 %v430, 8
      %v523 = vpop.permute.xlu0 %522
      %524 = vrot.lane.b32.xlu0 %v431, 8
      %v525 = vpop.permute.xlu0 %524
      %526 = vrot.lane.b32.xlu0 %v432, 8
      %v527 = vpop.permute.xlu0 %526
      %528 = vrot.lane.b32.xlu0 %v433, 8
      %v529 = vpop.permute.xlu0 %528
      %vm562 = vcmask 130112
      %563 = vst.msk [vmem:[#allocation3] sm:$0xff] %vm562, %v467
      %564 = vst.msk [vmem:[#allocation3 + $0x8] sm:$0xff] %vm562, %v469
      %565 = vst.msk [vmem:[#allocation3 + $0x10] sm:$0xff] %vm562, %v471
      %566 = vst.msk [vmem:[#allocation3 + $0x18] sm:$0xff] %vm562, %v473
      %567 = vst.msk [vmem:[#allocation3 + $0x20] sm:$0xff] %vm562, %v475
      %568 = vst.msk [vmem:[#allocation3 + $0x28] sm:$0xff] %vm562, %v477
      %569 = vst.msk [vmem:[#allocation3 + $0x30] sm:$0xff] %vm562, %v479
      %570 = vst.msk [vmem:[#allocation3 + $0x38] sm:$0xff] %vm562, %v481
      %571 = vst.msk [vmem:[#allocation3 + $0x40] sm:$0xff] %vm562, %v483
      %572 = vst.msk [vmem:[#allocation3 + $0x48] sm:$0xff] %vm562, %v485
      %573 = vst.msk [vmem:[#allocation3 + $0x50] sm:$0xff] %vm562, %v487
      %574 = vst.msk [vmem:[#allocation3 + $0x58] sm:$0xff] %vm562, %v489
      %575 = vst.msk [vmem:[#allocation3 + $0x60] sm:$0xff] %vm562, %v491
      %576 = vst.msk [vmem:[#allocation3 + $0x68] sm:$0xff] %vm562, %v493
      %577 = vst.msk [vmem:[#allocation3 + $0x70] sm:$0xff] %vm562, %v495
      %578 = vst.msk [vmem:[#allocation3 + $0x78] sm:$0xff] %vm562, %v497
      %579 = vst.msk [vmem:[#allocation3 + $0x80] sm:$0xff] %vm562, %v499
      %580 = vst.msk [vmem:[#allocation3 + $0x88] sm:$0xff] %vm562, %v501
      %581 = vst.msk [vmem:[#allocation3 + $0x90] sm:$0xff] %vm562, %v503
      %582 = vst.msk [vmem:[#allocation3 + $0x98] sm:$0xff] %vm562, %v505
      %583 = vst.msk [vmem:[#allocation3 + $0xa0] sm:$0xff] %vm562, %v507
      %584 = vst.msk [vmem:[#allocation3 + $0xa8] sm:$0xff] %vm562, %v509
      %585 = vst.msk [vmem:[#allocation3 + $0xb0] sm:$0xff] %vm562, %v511
      %586 = vst.msk [vmem:[#allocation3 + $0xb8] sm:$0xff] %vm562, %v513
      %587 = vst.msk [vmem:[#allocation3 + $0xc0] sm:$0xff] %vm562, %v515
      %588 = vst.msk [vmem:[#allocation3 + $0xc8] sm:$0xff] %vm562, %v517
      %589 = vst.msk [vmem:[#allocation3 + $0xd0] sm:$0xff] %vm562, %v519
      %590 = vst.msk [vmem:[#allocation3 + $0xd8] sm:$0xff] %vm562, %v521
      %591 = vst.msk [vmem:[#allocation3 + $0xe0] sm:$0xff] %vm562, %v523
      %592 = vst.msk [vmem:[#allocation3 + $0xe8] sm:$0xff] %vm562, %v525
      %593 = vst.msk [vmem:[#allocation3 + $0xf0] sm:$0xff] %vm562, %v527
      %594 = vst.msk [vmem:[#allocation3 + $0xf8] sm:$0xff] %vm562, %v529
      %v595 = vld [vmem:[#allocation2 + $0x2] sm:$0xff]
      %v596 = vld [vmem:[#allocation2 + $0xa] sm:$0xff]
      %v597 = vld [vmem:[#allocation2 + $0x1a] sm:$0xff]
      %v598 = vld [vmem:[#allocation2 + $0x22] sm:$0xff]
      %v599 = vld [vmem:[#allocation2 + $0x32] sm:$0xff]
      %v600 = vld [vmem:[#allocation2 + $0x3a] sm:$0xff]
      %v601 = vld [vmem:[#allocation2 + $0x4a] sm:$0xff]
      %v602 = vld [vmem:[#allocation2 + $0x52] sm:$0xff]
      %v603 = vld [vmem:[#allocation2 + $0x62] sm:$0xff]
      %v604 = vld [vmem:[#allocation2 + $0x6a] sm:$0xff]
      %v605 = vld [vmem:[#allocation2 + $0x7a] sm:$0xff]
      %v606 = vld [vmem:[#allocation2 + $0x82] sm:$0xff]
      %v607 = vld [vmem:[#allocation2 + $0x92] sm:$0xff]
      %v608 = vld [vmem:[#allocation2 + $0x9a] sm:$0xff]
      %v609 = vld [vmem:[#allocation2 + $0xaa] sm:$0xff]
      %v610 = vld [vmem:[#allocation2 + $0xb2] sm:$0xff]
      %v611 = vld [vmem:[#allocation2 + $0xc2] sm:$0xff]
      %v612 = vld [vmem:[#allocation2 + $0xca] sm:$0xff]
      %v613 = vld [vmem:[#allocation2 + $0xda] sm:$0xff]
      %v614 = vld [vmem:[#allocation2 + $0xe2] sm:$0xff]
      %v615 = vld [vmem:[#allocation2 + $0xf2] sm:$0xff]
      %v616 = vld [vmem:[#allocation2 + $0xfa] sm:$0xff]
      %v617 = vld [vmem:[#allocation2 + $0x10a] sm:$0xff]
      %v618 = vld [vmem:[#allocation2 + $0x112] sm:$0xff]
      %v619 = vld [vmem:[#allocation2 + $0x122] sm:$0xff]
      %v620 = vld [vmem:[#allocation2 + $0x12a] sm:$0xff]
      %v621 = vld [vmem:[#allocation2 + $0x13a] sm:$0xff]
      %v622 = vld [vmem:[#allocation2 + $0x142] sm:$0xff]
      %v623 = vld [vmem:[#allocation2 + $0x152] sm:$0xff]
      %v624 = vld [vmem:[#allocation2 + $0x15a] sm:$0xff]
      %v625 = vld [vmem:[#allocation2 + $0x16a] sm:$0xff]
      %v626 = vld [vmem:[#allocation2 + $0x172] sm:$0xff]
      %659 = vrot.lane.b32.xlu0 %v595, 16
      %v660 = vpop.permute.xlu0 %659
      %661 = vrot.lane.b32.xlu0 %v596, 16
      %v662 = vpop.permute.xlu0 %661
      %663 = vrot.lane.b32.xlu0 %v597, 16
      %v664 = vpop.permute.xlu0 %663
      %665 = vrot.lane.b32.xlu0 %v598, 16
      %v666 = vpop.permute.xlu0 %665
      %667 = vrot.lane.b32.xlu0 %v599, 16
      %v668 = vpop.permute.xlu0 %667
      %669 = vrot.lane.b32.xlu0 %v600, 16
      %v670 = vpop.permute.xlu0 %669
      %671 = vrot.lane.b32.xlu0 %v601, 16
      %v672 = vpop.permute.xlu0 %671
      %673 = vrot.lane.b32.xlu0 %v602, 16
      %v674 = vpop.permute.xlu0 %673
      %675 = vrot.lane.b32.xlu0 %v603, 16
      %v676 = vpop.permute.xlu0 %675
      %677 = vrot.lane.b32.xlu0 %v604, 16
      %v678 = vpop.permute.xlu0 %677
      %679 = vrot.lane.b32.xlu0 %v605, 16
      %v680 = vpop.permute.xlu0 %679
      %681 = vrot.lane.b32.xlu0 %v606, 16
      %v682 = vpop.permute.xlu0 %681
      %683 = vrot.lane.b32.xlu0 %v607, 16
      %v684 = vpop.permute.xlu0 %683
      %685 = vrot.lane.b32.xlu0 %v608, 16
      %v686 = vpop.permute.xlu0 %685
      %687 = vrot.lane.b32.xlu0 %v609, 16
      %v688 = vpop.permute.xlu0 %687
      %689 = vrot.lane.b32.xlu0 %v610, 16
      %v690 = vpop.permute.xlu0 %689
      %691 = vrot.lane.b32.xlu0 %v611, 16
      %v692 = vpop.permute.xlu0 %691
      %693 = vrot.lane.b32.xlu0 %v612, 16
      %v694 = vpop.permute.xlu0 %693
      %695 = vrot.lane.b32.xlu0 %v613, 16
      %v696 = vpop.permute.xlu0 %695
      %697 = vrot.lane.b32.xlu0 %v614, 16
      %v698 = vpop.permute.xlu0 %697
      %699 = vrot.lane.b32.xlu0 %v615, 16
      %v700 = vpop.permute.xlu0 %699
      %701 = vrot.lane.b32.xlu0 %v616, 16
      %v702 = vpop.permute.xlu0 %701
      %703 = vrot.lane.b32.xlu0 %v617, 16
      %v704 = vpop.permute.xlu0 %703
      %705 = vrot.lane.b32.xlu0 %v618, 16
      %v706 = vpop.permute.xlu0 %705
      %707 = vrot.lane.b32.xlu0 %v619, 16
      %v708 = vpop.permute.xlu0 %707
      %709 = vrot.lane.b32.xlu0 %v620, 16
      %v710 = vpop.permute.xlu0 %709
      %711 = vrot.lane.b32.xlu0 %v621, 16
      %v712 = vpop.permute.xlu0 %711
      %713 = vrot.lane.b32.xlu0 %v622, 16
      %v714 = vpop.permute.xlu0 %713
      %715 = vrot.lane.b32.xlu0 %v623, 16
      %v716 = vpop.permute.xlu0 %715
      %717 = vrot.lane.b32.xlu0 %v624, 16
      %v718 = vpop.permute.xlu0 %717
      %719 = vrot.lane.b32.xlu0 %v625, 16
      %v720 = vpop.permute.xlu0 %719
      %721 = vrot.lane.b32.xlu0 %v626, 16
      %v722 = vpop.permute.xlu0 %721
      %vm755 = vcmask 195712
      %756 = vst.msk [vmem:[#allocation3] sm:$0xff] %vm755, %v660
      %757 = vst.msk [vmem:[#allocation3 + $0x8] sm:$0xff] %vm755, %v662
      %758 = vst.msk [vmem:[#allocation3 + $0x10] sm:$0xff] %vm755, %v664
      %759 = vst.msk [vmem:[#allocation3 + $0x18] sm:$0xff] %vm755, %v666
      %760 = vst.msk [vmem:[#allocation3 + $0x20] sm:$0xff] %vm755, %v668
      %761 = vst.msk [vmem:[#allocation3 + $0x28] sm:$0xff] %vm755, %v670
      %762 = vst.msk [vmem:[#allocation3 + $0x30] sm:$0xff] %vm755, %v672
      %763 = vst.msk [vmem:[#allocation3 + $0x38] sm:$0xff] %vm755, %v674
      %764 = vst.msk [vmem:[#allocation3 + $0x40] sm:$0xff] %vm755, %v676
      %765 = vst.msk [vmem:[#allocation3 + $0x48] sm:$0xff] %vm755, %v678
      %766 = vst.msk [vmem:[#allocation3 + $0x50] sm:$0xff] %vm755, %v680
      %767 = vst.msk [vmem:[#allocation3 + $0x58] sm:$0xff] %vm755, %v682
      %768 = vst.msk [vmem:[#allocation3 + $0x60] sm:$0xff] %vm755, %v684
      %769 = vst.msk [vmem:[#allocation3 + $0x68] sm:$0xff] %vm755, %v686
      %770 = vst.msk [vmem:[#allocation3 + $0x70] sm:$0xff] %vm755, %v688
      %771 = vst.msk [vmem:[#allocation3 + $0x78] sm:$0xff] %vm755, %v690
      %772 = vst.msk [vmem:[#allocation3 + $0x80] sm:$0xff] %vm755, %v692
      %773 = vst.msk [vmem:[#allocation3 + $0x88] sm:$0xff] %vm755, %v694
      %774 = vst.msk [vmem:[#allocation3 + $0x90] sm:$0xff] %vm755, %v696
      %775 = vst.msk [vmem:[#allocation3 + $0x98] sm:$0xff] %vm755, %v698
      %776 = vst.msk [vmem:[#allocation3 + $0xa0] sm:$0xff] %vm755, %v700
      %777 = vst.msk [vmem:[#allocation3 + $0xa8] sm:$0xff] %vm755, %v702
      %778 = vst.msk [vmem:[#allocation3 + $0xb0] sm:$0xff] %vm755, %v704
      %779 = vst.msk [vmem:[#allocation3 + $0xb8] sm:$0xff] %vm755, %v706
      %780 = vst.msk [vmem:[#allocation3 + $0xc0] sm:$0xff] %vm755, %v708
      %781 = vst.msk [vmem:[#allocation3 + $0xc8] sm:$0xff] %vm755, %v710
      %782 = vst.msk [vmem:[#allocation3 + $0xd0] sm:$0xff] %vm755, %v712
      %783 = vst.msk [vmem:[#allocation3 + $0xd8] sm:$0xff] %vm755, %v714
      %784 = vst.msk [vmem:[#allocation3 + $0xe0] sm:$0xff] %vm755, %v716
      %785 = vst.msk [vmem:[#allocation3 + $0xe8] sm:$0xff] %vm755, %v718
      %786 = vst.msk [vmem:[#allocation3 + $0xf0] sm:$0xff] %vm755, %v720
      %787 = vst.msk [vmem:[#allocation3 + $0xf8] sm:$0xff] %vm755, %v722
      %v788 = vld [vmem:[%s305] sm:$0xff]
      %v789 = vld [vmem:[%s305 + $0x8] sm:$0xff]
      %v790 = vld [vmem:[%s305 + $0x18] sm:$0xff]
      %v791 = vld [vmem:[%s305 + $0x20] sm:$0xff]
      %v792 = vld [vmem:[%s305 + $0x30] sm:$0xff]
      %v793 = vld [vmem:[%s305 + $0x38] sm:$0xff]
      %v794 = vld [vmem:[%s305 + $0x48] sm:$0xff]
      %v795 = vld [vmem:[%s305 + $0x50] sm:$0xff]
      %v796 = vld [vmem:[%s305 + $0x60] sm:$0xff]
      %v797 = vld [vmem:[%s305 + $0x68] sm:$0xff]
      %v798 = vld [vmem:[%s305 + $0x78] sm:$0xff]
      %v799 = vld [vmem:[%s305 + $0x80] sm:$0xff]
      %v800 = vld [vmem:[%s305 + $0x90] sm:$0xff]
      %v801 = vld [vmem:[%s305 + $0x98] sm:$0xff]
      %v802 = vld [vmem:[%s305 + $0xa8] sm:$0xff]
      %v803 = vld [vmem:[%s305 + $0xb0] sm:$0xff]
      %v804 = vld [vmem:[%s305 + $0xc0] sm:$0xff]
      %v805 = vld [vmem:[%s305 + $0xc8] sm:$0xff]
      %v806 = vld [vmem:[%s305 + $0xd8] sm:$0xff]
      %v807 = vld [vmem:[%s305 + $0xe0] sm:$0xff]
      %v808 = vld [vmem:[%s305 + $0xf0] sm:$0xff]
      %v809 = vld [vmem:[%s305 + $0xf8] sm:$0xff]
      %v810 = vld [vmem:[%s305 + $0x108] sm:$0xff]
      %v811 = vld [vmem:[%s305 + $0x110] sm:$0xff]
      %v812 = vld [vmem:[%s305 + $0x120] sm:$0xff]
      %v813 = vld [vmem:[%s305 + $0x128] sm:$0xff]
      %v814 = vld [vmem:[%s305 + $0x138] sm:$0xff]
      %v815 = vld [vmem:[%s305 + $0x140] sm:$0xff]
      %v816 = vld [vmem:[%s305 + $0x150] sm:$0xff]
      %v817 = vld [vmem:[%s305 + $0x158] sm:$0xff]
      %v818 = vld [vmem:[%s305 + $0x168] sm:$0xff]
      %v819 = vld [vmem:[%s305 + $0x170] sm:$0xff]
      %852 = vrot.lane.b32.xlu0 %v788, 24
      %v853 = vpop.permute.xlu0 %852
      %854 = vrot.lane.b32.xlu0 %v789, 24
      %v855 = vpop.permute.xlu0 %854
      %856 = vrot.lane.b32.xlu0 %v790, 24
      %v857 = vpop.permute.xlu0 %856
      %858 = vrot.lane.b32.xlu0 %v791, 24
      %v859 = vpop.permute.xlu0 %858
      %860 = vrot.lane.b32.xlu0 %v792, 24
      %v861 = vpop.permute.xlu0 %860
      %862 = vrot.lane.b32.xlu0 %v793, 24
      %v863 = vpop.permute.xlu0 %862
      %864 = vrot.lane.b32.xlu0 %v794, 24
      %v865 = vpop.permute.xlu0 %864
      %866 = vrot.lane.b32.xlu0 %v795, 24
      %v867 = vpop.permute.xlu0 %866
      %868 = vrot.lane.b32.xlu0 %v796, 24
      %v869 = vpop.permute.xlu0 %868
      %870 = vrot.lane.b32.xlu0 %v797, 24
      %v871 = vpop.permute.xlu0 %870
      %872 = vrot.lane.b32.xlu0 %v798, 24
      %v873 = vpop.permute.xlu0 %872
      %874 = vrot.lane.b32.xlu0 %v799, 24
      %v875 = vpop.permute.xlu0 %874
      %876 = vrot.lane.b32.xlu0 %v800, 24
      %v877 = vpop.permute.xlu0 %876
      %878 = vrot.lane.b32.xlu0 %v801, 24
      %v879 = vpop.permute.xlu0 %878
      %880 = vrot.lane.b32.xlu0 %v802, 24
      %v881 = vpop.permute.xlu0 %880
      %882 = vrot.lane.b32.xlu0 %v803, 24
      %v883 = vpop.permute.xlu0 %882
      %884 = vrot.lane.b32.xlu0 %v804, 24
      %v885 = vpop.permute.xlu0 %884
      %886 = vrot.lane.b32.xlu0 %v805, 24
      %v887 = vpop.permute.xlu0 %886
      %888 = vrot.lane.b32.xlu0 %v806, 24
      %v889 = vpop.permute.xlu0 %888
      %890 = vrot.lane.b32.xlu0 %v807, 24
      %v891 = vpop.permute.xlu0 %890
      %892 = vrot.lane.b32.xlu0 %v808, 24
      %v893 = vpop.permute.xlu0 %892
      %894 = vrot.lane.b32.xlu0 %v809, 24
      %v895 = vpop.permute.xlu0 %894
      %896 = vrot.lane.b32.xlu0 %v810, 24
      %v897 = vpop.permute.xlu0 %896
      %898 = vrot.lane.b32.xlu0 %v811, 24
      %v899 = vpop.permute.xlu0 %898
      %900 = vrot.lane.b32.xlu0 %v812, 24
      %v901 = vpop.permute.xlu0 %900
      %902 = vrot.lane.b32.xlu0 %v813, 24
      %v903 = vpop.permute.xlu0 %902
      %904 = vrot.lane.b32.xlu0 %v814, 24
      %v905 = vpop.permute.xlu0 %904
      %906 = vrot.lane.b32.xlu0 %v815, 24
      %v907 = vpop.permute.xlu0 %906
      %908 = vrot.lane.b32.xlu0 %v816, 24
      %v909 = vpop.permute.xlu0 %908
      %910 = vrot.lane.b32.xlu0 %v817, 24
      %v911 = vpop.permute.xlu0 %910
      %912 = vrot.lane.b32.xlu0 %v818, 24
      %v913 = vpop.permute.xlu0 %912
      %914 = vrot.lane.b32.xlu0 %v819, 24
      %v915 = vpop.permute.xlu0 %914
      %vm948 = vcmask 261312
      %949 = vst.msk [vmem:[#allocation3] sm:$0xff] %vm948, %v853
      %950 = vst.msk [vmem:[#allocation3 + $0x8] sm:$0xff] %vm948, %v855
      %951 = vst.msk [vmem:[#allocation3 + $0x10] sm:$0xff] %vm948, %v857
      %952 = vst.msk [vmem:[#allocation3 + $0x18] sm:$0xff] %vm948, %v859
      %953 = vst.msk [vmem:[#allocation3 + $0x20] sm:$0xff] %vm948, %v861
      %954 = vst.msk [vmem:[#allocation3 + $0x28] sm:$0xff] %vm948, %v863
      %955 = vst.msk [vmem:[#allocation3 + $0x30] sm:$0xff] %vm948, %v865
      %956 = vst.msk [vmem:[#allocation3 + $0x38] sm:$0xff] %vm948, %v867
      %957 = vst.msk [vmem:[#allocation3 + $0x40] sm:$0xff] %vm948, %v869
      %958 = vst.msk [vmem:[#allocation3 + $0x48] sm:$0xff] %vm948, %v871
      %959 = vst.msk [vmem:[#allocation3 + $0x50] sm:$0xff] %vm948, %v873
      %960 = vst.msk [vmem:[#allocation3 + $0x58] sm:$0xff] %vm948, %v875
      %961 = vst.msk [vmem:[#allocation3 + $0x60] sm:$0xff] %vm948, %v877
      %962 = vst.msk [vmem:[#allocation3 + $0x68] sm:$0xff] %vm948, %v879
      %963 = vst.msk [vmem:[#allocation3 + $0x70] sm:$0xff] %vm948, %v881
      %964 = vst.msk [vmem:[#allocation3 + $0x78] sm:$0xff] %vm948, %v883
      %965 = vst.msk [vmem:[#allocation3 + $0x80] sm:$0xff] %vm948, %v885
      %966 = vst.msk [vmem:[#allocation3 + $0x88] sm:$0xff] %vm948, %v887
      %967 = vst.msk [vmem:[#allocation3 + $0x90] sm:$0xff] %vm948, %v889
      %968 = vst.msk [vmem:[#allocation3 + $0x98] sm:$0xff] %vm948, %v891
      %969 = vst.msk [vmem:[#allocation3 + $0xa0] sm:$0xff] %vm948, %v893
      %970 = vst.msk [vmem:[#allocation3 + $0xa8] sm:$0xff] %vm948, %v895
      %971 = vst.msk [vmem:[#allocation3 + $0xb0] sm:$0xff] %vm948, %v897
      %972 = vst.msk [vmem:[#allocation3 + $0xb8] sm:$0xff] %vm948, %v899
      %973 = vst.msk [vmem:[#allocation3 + $0xc0] sm:$0xff] %vm948, %v901
      %974 = vst.msk [vmem:[#allocation3 + $0xc8] sm:$0xff] %vm948, %v903
      %975 = vst.msk [vmem:[#allocation3 + $0xd0] sm:$0xff] %vm948, %v905
      %976 = vst.msk [vmem:[#allocation3 + $0xd8] sm:$0xff] %vm948, %v907
      %977 = vst.msk [vmem:[#allocation3 + $0xe0] sm:$0xff] %vm948, %v909
      %978 = vst.msk [vmem:[#allocation3 + $0xe8] sm:$0xff] %vm948, %v911
      %979 = vst.msk [vmem:[#allocation3 + $0xf0] sm:$0xff] %vm948, %v913
      %980 = vst.msk [vmem:[#allocation3 + $0xf8] sm:$0xff] %vm948, %v915
      %v981 = vld [vmem:[%s305 + $0x1] sm:$0xff]
      %v982 = vld [vmem:[%s305 + $0x9] sm:$0xff]
      %v983 = vld [vmem:[%s305 + $0x19] sm:$0xff]
      %v984 = vld [vmem:[%s305 + $0x21] sm:$0xff]
      %v985 = vld [vmem:[%s305 + $0x31] sm:$0xff]
      %v986 = vld [vmem:[%s305 + $0x39] sm:$0xff]
      %v987 = vld [vmem:[%s305 + $0x49] sm:$0xff]
      %v988 = vld [vmem:[%s305 + $0x51] sm:$0xff]
      %v989 = vld [vmem:[%s305 + $0x61] sm:$0xff]
      %v990 = vld [vmem:[%s305 + $0x69] sm:$0xff]
      %v991 = vld [vmem:[%s305 + $0x79] sm:$0xff]
      %v992 = vld [vmem:[%s305 + $0x81] sm:$0xff]
      %v993 = vld [vmem:[%s305 + $0x91] sm:$0xff]
      %v994 = vld [vmem:[%s305 + $0x99] sm:$0xff]
      %v995 = vld [vmem:[%s305 + $0xa9] sm:$0xff]
      %v996 = vld [vmem:[%s305 + $0xb1] sm:$0xff]
      %v997 = vld [vmem:[%s305 + $0xc1] sm:$0xff]
      %v998 = vld [vmem:[%s305 + $0xc9] sm:$0xff]
      %v999 = vld [vmem:[%s305 + $0xd9] sm:$0xff]
      %v1000 = vld [vmem:[%s305 + $0xe1] sm:$0xff]
      %v1001 = vld [vmem:[%s305 + $0xf1] sm:$0xff]
      %v1002 = vld [vmem:[%s305 + $0xf9] sm:$0xff]
      %v1003 = vld [vmem:[%s305 + $0x109] sm:$0xff]
      %v1004 = vld [vmem:[%s305 + $0x111] sm:$0xff]
      %v1005 = vld [vmem:[%s305 + $0x121] sm:$0xff]
      %v1006 = vld [vmem:[%s305 + $0x129] sm:$0xff]
      %v1007 = vld [vmem:[%s305 + $0x139] sm:$0xff]
      %v1008 = vld [vmem:[%s305 + $0x141] sm:$0xff]
      %v1009 = vld [vmem:[%s305 + $0x151] sm:$0xff]
      %v1010 = vld [vmem:[%s305 + $0x159] sm:$0xff]
      %v1011 = vld [vmem:[%s305 + $0x169] sm:$0xff]
      %v1012 = vld [vmem:[%s305 + $0x171] sm:$0xff]
      %1045 = vrot.lane.b32.xlu0 %v981, 32
      %v1046 = vpop.permute.xlu0 %1045
      %1047 = vrot.lane.b32.xlu0 %v982, 32
      %v1048 = vpop.permute.xlu0 %1047
      %1049 = vrot.lane.b32.xlu0 %v983, 32
      %v1050 = vpop.permute.xlu0 %1049
      %1051 = vrot.lane.b32.xlu0 %v984, 32
      %v1052 = vpop.permute.xlu0 %1051
      %1053 = vrot.lane.b32.xlu0 %v985, 32
      %v1054 = vpop.permute.xlu0 %1053
      %1055 = vrot.lane.b32.xlu0 %v986, 32
      %v1056 = vpop.permute.xlu0 %1055
      %1057 = vrot.lane.b32.xlu0 %v987, 32
      %v1058 = vpop.permute.xlu0 %1057
      %1059 = vrot.lane.b32.xlu0 %v988, 32
      %v1060 = vpop.permute.xlu0 %1059
      %1061 = vrot.lane.b32.xlu0 %v989, 32
      %v1062 = vpop.permute.xlu0 %1061
      %1063 = vrot.lane.b32.xlu0 %v990, 32
      %v1064 = vpop.permute.xlu0 %1063
      %1065 = vrot.lane.b32.xlu0 %v991, 32
      %v1066 = vpop.permute.xlu0 %1065
      %1067 = vrot.lane.b32.xlu0 %v992, 32
      %v1068 = vpop.permute.xlu0 %1067
      %1069 = vrot.lane.b32.xlu0 %v993, 32
      %v1070 = vpop.permute.xlu0 %1069
      %1071 = vrot.lane.b32.xlu0 %v994, 32
      %v1072 = vpop.permute.xlu0 %1071
      %1073 = vrot.lane.b32.xlu0 %v995, 32
      %v1074 = vpop.permute.xlu0 %1073
      %1075 = vrot.lane.b32.xlu0 %v996, 32
      %v1076 = vpop.permute.xlu0 %1075
      %1077 = vrot.lane.b32.xlu0 %v997, 32
      %v1078 = vpop.permute.xlu0 %1077
      %1079 = vrot.lane.b32.xlu0 %v998, 32
      %v1080 = vpop.permute.xlu0 %1079
      %1081 = vrot.lane.b32.xlu0 %v999, 32
      %v1082 = vpop.permute.xlu0 %1081
      %1083 = vrot.lane.b32.xlu0 %v1000, 32
      %v1084 = vpop.permute.xlu0 %1083
      %1085 = vrot.lane.b32.xlu0 %v1001, 32
      %v1086 = vpop.permute.xlu0 %1085
      %1087 = vrot.lane.b32.xlu0 %v1002, 32
      %v1088 = vpop.permute.xlu0 %1087
      %1089 = vrot.lane.b32.xlu0 %v1003, 32
      %v1090 = vpop.permute.xlu0 %1089
      %1091 = vrot.lane.b32.xlu0 %v1004, 32
      %v1092 = vpop.permute.xlu0 %1091
      %1093 = vrot.lane.b32.xlu0 %v1005, 32
      %v1094 = vpop.permute.xlu0 %1093
      %1095 = vrot.lane.b32.xlu0 %v1006, 32
      %v1096 = vpop.permute.xlu0 %1095
      %1097 = vrot.lane.b32.xlu0 %v1007, 32
      %v1098 = vpop.permute.xlu0 %1097
      %1099 = vrot.lane.b32.xlu0 %v1008, 32
      %v1100 = vpop.permute.xlu0 %1099
      %1101 = vrot.lane.b32.xlu0 %v1009, 32
      %v1102 = vpop.permute.xlu0 %1101
      %1103 = vrot.lane.b32.xlu0 %v1010, 32
      %v1104 = vpop.permute.xlu0 %1103
      %1105 = vrot.lane.b32.xlu0 %v1011, 32
      %v1106 = vpop.permute.xlu0 %1105
      %1107 = vrot.lane.b32.xlu0 %v1012, 32
      %v1108 = vpop.permute.xlu0 %1107
      %vm1141 = vcmask 326912
      %1142 = vst.msk [vmem:[#allocation3] sm:$0xff] %vm1141, %v1046
      %1143 = vst.msk [vmem:[#allocation3 + $0x8] sm:$0xff] %vm1141, %v1048
      %1144 = vst.msk [vmem:[#allocation3 + $0x10] sm:$0xff] %vm1141, %v1050
      %1145 = vst.msk [vmem:[#allocation3 + $0x18] sm:$0xff] %vm1141, %v1052
      %1146 = vst.msk [vmem:[#allocation3 + $0x20] sm:$0xff] %vm1141, %v1054
      %1147 = vst.msk [vmem:[#allocation3 + $0x28] sm:$0xff] %vm1141, %v1056
      %1148 = vst.msk [vmem:[#allocation3 + $0x30] sm:$0xff] %vm1141, %v1058
      %1149 = vst.msk [vmem:[#allocation3 + $0x38] sm:$0xff] %vm1141, %v1060
      %1150 = vst.msk [vmem:[#allocation3 + $0x40] sm:$0xff] %vm1141, %v1062
      %1151 = vst.msk [vmem:[#allocation3 + $0x48] sm:$0xff] %vm1141, %v1064
      %1152 = vst.msk [vmem:[#allocation3 + $0x50] sm:$0xff] %vm1141, %v1066
      %1153 = vst.msk [vmem:[#allocation3 + $0x58] sm:$0xff] %vm1141, %v1068
      %1154 = vst.msk [vmem:[#allocation3 + $0x60] sm:$0xff] %vm1141, %v1070
      %1155 = vst.msk [vmem:[#allocation3 + $0x68] sm:$0xff] %vm1141, %v1072
      %1156 = vst.msk [vmem:[#allocation3 + $0x70] sm:$0xff] %vm1141, %v1074
      %1157 = vst.msk [vmem:[#allocation3 + $0x78] sm:$0xff] %vm1141, %v1076
      %1158 = vst.msk [vmem:[#allocation3 + $0x80] sm:$0xff] %vm1141, %v1078
      %1159 = vst.msk [vmem:[#allocation3 + $0x88] sm:$0xff] %vm1141, %v1080
      %1160 = vst.msk [vmem:[#allocation3 + $0x90] sm:$0xff] %vm1141, %v1082
      %1161 = vst.msk [vmem:[#allocation3 + $0x98] sm:$0xff] %vm1141, %v1084
      %1162 = vst.msk [vmem:[#allocation3 + $0xa0] sm:$0xff] %vm1141, %v1086
      %1163 = vst.msk [vmem:[#allocation3 + $0xa8] sm:$0xff] %vm1141, %v1088
      %1164 = vst.msk [vmem:[#allocation3 + $0xb0] sm:$0xff] %vm1141, %v1090
      %1165 = vst.msk [vmem:[#allocation3 + $0xb8] sm:$0xff] %vm1141, %v1092
      %1166 = vst.msk [vmem:[#allocation3 + $0xc0] sm:$0xff] %vm1141, %v1094
      %1167 = vst.msk [vmem:[#allocation3 + $0xc8] sm:$0xff] %vm1141, %v1096
      %1168 = vst.msk [vmem:[#allocation3 + $0xd0] sm:$0xff] %vm1141, %v1098
      %1169 = vst.msk [vmem:[#allocation3 + $0xd8] sm:$0xff] %vm1141, %v1100
      %1170 = vst.msk [vmem:[#allocation3 + $0xe0] sm:$0xff] %vm1141, %v1102
      %1171 = vst.msk [vmem:[#allocation3 + $0xe8] sm:$0xff] %vm1141, %v1104
      %1172 = vst.msk [vmem:[#allocation3 + $0xf0] sm:$0xff] %vm1141, %v1106
      %1173 = vst.msk [vmem:[#allocation3 + $0xf8] sm:$0xff] %vm1141, %v1108
      %v1174 = vld [vmem:[%s305 + $0x2] sm:$0xff]
      %v1175 = vld [vmem:[%s305 + $0xa] sm:$0xff]
      %v1176 = vld [vmem:[%s305 + $0x1a] sm:$0xff]
      %v1177 = vld [vmem:[%s305 + $0x22] sm:$0xff]
      %v1178 = vld [vmem:[%s305 + $0x32] sm:$0xff]
      %v1179 = vld [vmem:[%s305 + $0x3a] sm:$0xff]
      %v1180 = vld [vmem:[%s305 + $0x4a] sm:$0xff]
      %v1181 = vld [vmem:[%s305 + $0x52] sm:$0xff]
      %v1182 = vld [vmem:[%s305 + $0x62] sm:$0xff]
      %v1183 = vld [vmem:[%s305 + $0x6a] sm:$0xff]
      %v1184 = vld [vmem:[%s305 + $0x7a] sm:$0xff]
      %v1185 = vld [vmem:[%s305 + $0x82] sm:$0xff]
      %v1186 = vld [vmem:[%s305 + $0x92] sm:$0xff]
      %v1187 = vld [vmem:[%s305 + $0x9a] sm:$0xff]
      %v1188 = vld [vmem:[%s305 + $0xaa] sm:$0xff]
      %v1189 = vld [vmem:[%s305 + $0xb2] sm:$0xff]
      %v1190 = vld [vmem:[%s305 + $0xc2] sm:$0xff]
      %v1191 = vld [vmem:[%s305 + $0xca] sm:$0xff]
      %v1192 = vld [vmem:[%s305 + $0xda] sm:$0xff]
      %v1193 = vld [vmem:[%s305 + $0xe2] sm:$0xff]
      %v1194 = vld [vmem:[%s305 + $0xf2] sm:$0xff]
      %v1195 = vld [vmem:[%s305 + $0xfa] sm:$0xff]
      %v1196 = vld [vmem:[%s305 + $0x10a] sm:$0xff]
      %v1197 = vld [vmem:[%s305 + $0x112] sm:$0xff]
      %v1198 = vld [vmem:[%s305 + $0x122] sm:$0xff]
      %v1199 = vld [vmem:[%s305 + $0x12a] sm:$0xff]
      %v1200 = vld [vmem:[%s305 + $0x13a] sm:$0xff]
      %v1201 = vld [vmem:[%s305 + $0x142] sm:$0xff]
      %v1202 = vld [vmem:[%s305 + $0x152] sm:$0xff]
      %v1203 = vld [vmem:[%s305 + $0x15a] sm:$0xff]
      %v1204 = vld [vmem:[%s305 + $0x16a] sm:$0xff]
      %v1205 = vld [vmem:[%s305 + $0x172] sm:$0xff]
      %1238 = vrot.lane.b32.xlu0 %v1174, 40
      %v1239 = vpop.permute.xlu0 %1238
      %1240 = vrot.lane.b32.xlu0 %v1175, 40
      %v1241 = vpop.permute.xlu0 %1240
      %1242 = vrot.lane.b32.xlu0 %v1176, 40
      %v1243 = vpop.permute.xlu0 %1242
      %1244 = vrot.lane.b32.xlu0 %v1177, 40
      %v1245 = vpop.permute.xlu0 %1244
      %1246 = vrot.lane.b32.xlu0 %v1178, 40
      %v1247 = vpop.permute.xlu0 %1246
      %1248 = vrot.lane.b32.xlu0 %v1179, 40
      %v1249 = vpop.permute.xlu0 %1248
      %1250 = vrot.lane.b32.xlu0 %v1180, 40
      %v1251 = vpop.permute.xlu0 %1250
      %1252 = vrot.lane.b32.xlu0 %v1181, 40
      %v1253 = vpop.permute.xlu0 %1252
      %1254 = vrot.lane.b32.xlu0 %v1182, 40
      %v1255 = vpop.permute.xlu0 %1254
      %1256 = vrot.lane.b32.xlu0 %v1183, 40
      %v1257 = vpop.permute.xlu0 %1256
      %1258 = vrot.lane.b32.xlu0 %v1184, 40
      %v1259 = vpop.permute.xlu0 %1258
      %1260 = vrot.lane.b32.xlu0 %v1185, 40
      %v1261 = vpop.permute.xlu0 %1260
      %1262 = vrot.lane.b32.xlu0 %v1186, 40
      %v1263 = vpop.permute.xlu0 %1262
      %1264 = vrot.lane.b32.xlu0 %v1187, 40
      %v1265 = vpop.permute.xlu0 %1264
      %1266 = vrot.lane.b32.xlu0 %v1188, 40
      %v1267 = vpop.permute.xlu0 %1266
      %1268 = vrot.lane.b32.xlu0 %v1189, 40
      %v1269 = vpop.permute.xlu0 %1268
      %1270 = vrot.lane.b32.xlu0 %v1190, 40
      %v1271 = vpop.permute.xlu0 %1270
      %1272 = vrot.lane.b32.xlu0 %v1191, 40
      %v1273 = vpop.permute.xlu0 %1272
      %1274 = vrot.lane.b32.xlu0 %v1192, 40
      %v1275 = vpop.permute.xlu0 %1274
      %1276 = vrot.lane.b32.xlu0 %v1193, 40
      %v1277 = vpop.permute.xlu0 %1276
      %1278 = vrot.lane.b32.xlu0 %v1194, 40
      %v1279 = vpop.permute.xlu0 %1278
      %1280 = vrot.lane.b32.xlu0 %v1195, 40
      %v1281 = vpop.permute.xlu0 %1280
      %1282 = vrot.lane.b32.xlu0 %v1196, 40
      %v1283 = vpop.permute.xlu0 %1282
      %1284 = vrot.lane.b32.xlu0 %v1197, 40
      %v1285 = vpop.permute.xlu0 %1284
      %1286 = vrot.lane.b32.xlu0 %v1198, 40
      %v1287 = vpop.permute.xlu0 %1286
      %1288 = vrot.lane.b32.xlu0 %v1199, 40
      %v1289 = vpop.permute.xlu0 %1288
      %1290 = vrot.lane.b32.xlu0 %v1200, 40
      %v1291 = vpop.permute.xlu0 %1290
      %1292 = vrot.lane.b32.xlu0 %v1201, 40
      %v1293 = vpop.permute.xlu0 %1292
      %1294 = vrot.lane.b32.xlu0 %v1202, 40
      %v1295 = vpop.permute.xlu0 %1294
      %1296 = vrot.lane.b32.xlu0 %v1203, 40
      %v1297 = vpop.permute.xlu0 %1296
      %1298 = vrot.lane.b32.xlu0 %v1204, 40
      %v1299 = vpop.permute.xlu0 %1298
      %1300 = vrot.lane.b32.xlu0 %v1205, 40
      %v1301 = vpop.permute.xlu0 %1300
      %vm1334 = vcmask 392512
      %1335 = vst.msk [vmem:[#allocation3] sm:$0xff] %vm1334, %v1239
      %1336 = vst.msk [vmem:[#allocation3 + $0x8] sm:$0xff] %vm1334, %v1241
      %1337 = vst.msk [vmem:[#allocation3 + $0x10] sm:$0xff] %vm1334, %v1243
      %1338 = vst.msk [vmem:[#allocation3 + $0x18] sm:$0xff] %vm1334, %v1245
      %1339 = vst.msk [vmem:[#allocation3 + $0x20] sm:$0xff] %vm1334, %v1247
      %1340 = vst.msk [vmem:[#allocation3 + $0x28] sm:$0xff] %vm1334, %v1249
      %1341 = vst.msk [vmem:[#allocation3 + $0x30] sm:$0xff] %vm1334, %v1251
      %1342 = vst.msk [vmem:[#allocation3 + $0x38] sm:$0xff] %vm1334, %v1253
      %1343 = vst.msk [vmem:[#allocation3 + $0x40] sm:$0xff] %vm1334, %v1255
      %1344 = vst.msk [vmem:[#allocation3 + $0x48] sm:$0xff] %vm1334, %v1257
      %1345 = vst.msk [vmem:[#allocation3 + $0x50] sm:$0xff] %vm1334, %v1259
      %1346 = vst.msk [vmem:[#allocation3 + $0x58] sm:$0xff] %vm1334, %v1261
      %1347 = vst.msk [vmem:[#allocation3 + $0x60] sm:$0xff] %vm1334, %v1263
      %1348 = vst.msk [vmem:[#allocation3 + $0x68] sm:$0xff] %vm1334, %v1265
      %1349 = vst.msk [vmem:[#allocation3 + $0x70] sm:$0xff] %vm1334, %v1267
      %1350 = vst.msk [vmem:[#allocation3 + $0x78] sm:$0xff] %vm1334, %v1269
      %1351 = vst.msk [vmem:[#allocation3 + $0x80] sm:$0xff] %vm1334, %v1271
      %1352 = vst.msk [vmem:[#allocation3 + $0x88] sm:$0xff] %vm1334, %v1273
      %1353 = vst.msk [vmem:[#allocation3 + $0x90] sm:$0xff] %vm1334, %v1275
      %1354 = vst.msk [vmem:[#allocation3 + $0x98] sm:$0xff] %vm1334, %v1277
      %1355 = vst.msk [vmem:[#allocation3 + $0xa0] sm:$0xff] %vm1334, %v1279
      %1356 = vst.msk [vmem:[#allocation3 + $0xa8] sm:$0xff] %vm1334, %v1281
      %1357 = vst.msk [vmem:[#allocation3 + $0xb0] sm:$0xff] %vm1334, %v1283
      %1358 = vst.msk [vmem:[#allocation3 + $0xb8] sm:$0xff] %vm1334, %v1285
      %1359 = vst.msk [vmem:[#allocation3 + $0xc0] sm:$0xff] %vm1334, %v1287
      %1360 = vst.msk [vmem:[#allocation3 + $0xc8] sm:$0xff] %vm1334, %v1289
      %1361 = vst.msk [vmem:[#allocation3 + $0xd0] sm:$0xff] %vm1334, %v1291
      %1362 = vst.msk [vmem:[#allocation3 + $0xd8] sm:$0xff] %vm1334, %v1293
      %1363 = vst.msk [vmem:[#allocation3 + $0xe0] sm:$0xff] %vm1334, %v1295
      %1364 = vst.msk [vmem:[#allocation3 + $0xe8] sm:$0xff] %vm1334, %v1297
      %1365 = vst.msk [vmem:[#allocation3 + $0xf0] sm:$0xff] %vm1334, %v1299
      %1366 = vst.msk [vmem:[#allocation3 + $0xf8] sm:$0xff] %vm1334, %v1301
      %s1367 = scalar_lea.vmem [#allocation2], 48
      %v1368 = vld [vmem:[%s1367] sm:$0xff]
      %v1369 = vld [vmem:[%s1367 + $0x8] sm:$0xff]
      %v1370 = vld [vmem:[%s1367 + $0x18] sm:$0xff]
      %v1371 = vld [vmem:[%s1367 + $0x20] sm:$0xff]
      %v1372 = vld [vmem:[%s1367 + $0x30] sm:$0xff]
      %v1373 = vld [vmem:[%s1367 + $0x38] sm:$0xff]
      %v1374 = vld [vmem:[%s1367 + $0x48] sm:$0xff]
      %v1375 = vld [vmem:[%s1367 + $0x50] sm:$0xff]
      %v1376 = vld [vmem:[%s1367 + $0x60] sm:$0xff]
      %v1377 = vld [vmem:[%s1367 + $0x68] sm:$0xff]
      %v1378 = vld [vmem:[%s1367 + $0x78] sm:$0xff]
      %v1379 = vld [vmem:[%s1367 + $0x80] sm:$0xff]
      %v1380 = vld [vmem:[%s1367 + $0x90] sm:$0xff]
      %v1381 = vld [vmem:[%s1367 + $0x98] sm:$0xff]
      %v1382 = vld [vmem:[%s1367 + $0xa8] sm:$0xff]
      %v1383 = vld [vmem:[%s1367 + $0xb0] sm:$0xff]
      %v1384 = vld [vmem:[%s1367 + $0xc0] sm:$0xff]
      %v1385 = vld [vmem:[%s1367 + $0xc8] sm:$0xff]
      %v1386 = vld [vmem:[%s1367 + $0xd8] sm:$0xff]
      %v1387 = vld [vmem:[%s1367 + $0xe0] sm:$0xff]
      %v1388 = vld [vmem:[%s1367 + $0xf0] sm:$0xff]
      %v1389 = vld [vmem:[%s1367 + $0xf8] sm:$0xff]
      %v1390 = vld [vmem:[%s1367 + $0x108] sm:$0xff]
      %v1391 = vld [vmem:[%s1367 + $0x110] sm:$0xff]
      %v1392 = vld [vmem:[%s1367 + $0x120] sm:$0xff]
      %v1393 = vld [vmem:[%s1367 + $0x128] sm:$0xff]
      %v1394 = vld [vmem:[%s1367 + $0x138] sm:$0xff]
      %v1395 = vld [vmem:[%s1367 + $0x140] sm:$0xff]
      %v1396 = vld [vmem:[%s1367 + $0x150] sm:$0xff]
      %v1397 = vld [vmem:[%s1367 + $0x158] sm:$0xff]
      %v1398 = vld [vmem:[%s1367 + $0x168] sm:$0xff]
      %v1399 = vld [vmem:[%s1367 + $0x170] sm:$0xff]
      %1432 = vrot.lane.b32.xlu0 %v1368, 48
      %v1433 = vpop.permute.xlu0 %1432
      %1434 = vrot.lane.b32.xlu0 %v1369, 48
      %v1435 = vpop.permute.xlu0 %1434
      %1436 = vrot.lane.b32.xlu0 %v1370, 48
      %v1437 = vpop.permute.xlu0 %1436
      %1438 = vrot.lane.b32.xlu0 %v1371, 48
      %v1439 = vpop.permute.xlu0 %1438
      %1440 = vrot.lane.b32.xlu0 %v1372, 48
      %v1441 = vpop.permute.xlu0 %1440
      %1442 = vrot.lane.b32.xlu0 %v1373, 48
      %v1443 = vpop.permute.xlu0 %1442
      %1444 = vrot.lane.b32.xlu0 %v1374, 48
      %v1445 = vpop.permute.xlu0 %1444
      %1446 = vrot.lane.b32.xlu0 %v1375, 48
      %v1447 = vpop.permute.xlu0 %1446
      %1448 = vrot.lane.b32.xlu0 %v1376, 48
      %v1449 = vpop.permute.xlu0 %1448
      %1450 = vrot.lane.b32.xlu0 %v1377, 48
      %v1451 = vpop.permute.xlu0 %1450
      %1452 = vrot.lane.b32.xlu0 %v1378, 48
      %v1453 = vpop.permute.xlu0 %1452
      %1454 = vrot.lane.b32.xlu0 %v1379, 48
      %v1455 = vpop.permute.xlu0 %1454
      %1456 = vrot.lane.b32.xlu0 %v1380, 48
      %v1457 = vpop.permute.xlu0 %1456
      %1458 = vrot.lane.b32.xlu0 %v1381, 48
      %v1459 = vpop.permute.xlu0 %1458
      %1460 = vrot.lane.b32.xlu0 %v1382, 48
      %v1461 = vpop.permute.xlu0 %1460
      %1462 = vrot.lane.b32.xlu0 %v1383, 48
      %v1463 = vpop.permute.xlu0 %1462
      %1464 = vrot.lane.b32.xlu0 %v1384, 48
      %v1465 = vpop.permute.xlu0 %1464
      %1466 = vrot.lane.b32.xlu0 %v1385, 48
      %v1467 = vpop.permute.xlu0 %1466
      %1468 = vrot.lane.b32.xlu0 %v1386, 48
      %v1469 = vpop.permute.xlu0 %1468
      %1470 = vrot.lane.b32.xlu0 %v1387, 48
      %v1471 = vpop.permute.xlu0 %1470
      %1472 = vrot.lane.b32.xlu0 %v1388, 48
      %v1473 = vpop.permute.xlu0 %1472
      %1474 = vrot.lane.b32.xlu0 %v1389, 48
      %v1475 = vpop.permute.xlu0 %1474
      %1476 = vrot.lane.b32.xlu0 %v1390, 48
      %v1477 = vpop.permute.xlu0 %1476
      %1478 = vrot.lane.b32.xlu0 %v1391, 48
      %v1479 = vpop.permute.xlu0 %1478
      %1480 = vrot.lane.b32.xlu0 %v1392, 48
      %v1481 = vpop.permute.xlu0 %1480
      %1482 = vrot.lane.b32.xlu0 %v1393, 48
      %v1483 = vpop.permute.xlu0 %1482
      %1484 = vrot.lane.b32.xlu0 %v1394, 48
      %v1485 = vpop.permute.xlu0 %1484
      %1486 = vrot.lane.b32.xlu0 %v1395, 48
      %v1487 = vpop.permute.xlu0 %1486
      %1488 = vrot.lane.b32.xlu0 %v1396, 48
      %v1489 = vpop.permute.xlu0 %1488
      %1490 = vrot.lane.b32.xlu0 %v1397, 48
      %v1491 = vpop.permute.xlu0 %1490
      %1492 = vrot.lane.b32.xlu0 %v1398, 48
      %v1493 = vpop.permute.xlu0 %1492
      %1494 = vrot.lane.b32.xlu0 %v1399, 48
      %v1495 = vpop.permute.xlu0 %1494
      %vm1528 = vcmask 458112
      %1529 = vst.msk [vmem:[#allocation3] sm:$0xff] %vm1528, %v1433
      %1530 = vst.msk [vmem:[#allocation3 + $0x8] sm:$0xff] %vm1528, %v1435
      %1531 = vst.msk [vmem:[#allocation3 + $0x10] sm:$0xff] %vm1528, %v1437
      %1532 = vst.msk [vmem:[#allocation3 + $0x18] sm:$0xff] %vm1528, %v1439
      %1533 = vst.msk [vmem:[#allocation3 + $0x20] sm:$0xff] %vm1528, %v1441
      %1534 = vst.msk [vmem:[#allocation3 + $0x28] sm:$0xff] %vm1528, %v1443
      %1535 = vst.msk [vmem:[#allocation3 + $0x30] sm:$0xff] %vm1528, %v1445
      %1536 = vst.msk [vmem:[#allocation3 + $0x38] sm:$0xff] %vm1528, %v1447
      %1537 = vst.msk [vmem:[#allocation3 + $0x40] sm:$0xff] %vm1528, %v1449
      %1538 = vst.msk [vmem:[#allocation3 + $0x48] sm:$0xff] %vm1528, %v1451
      %1539 = vst.msk [vmem:[#allocation3 + $0x50] sm:$0xff] %vm1528, %v1453
      %1540 = vst.msk [vmem:[#allocation3 + $0x58] sm:$0xff] %vm1528, %v1455
      %1541 = vst.msk [vmem:[#allocation3 + $0x60] sm:$0xff] %vm1528, %v1457
      %1542 = vst.msk [vmem:[#allocation3 + $0x68] sm:$0xff] %vm1528, %v1459
      %1543 = vst.msk [vmem:[#allocation3 + $0x70] sm:$0xff] %vm1528, %v1461
      %1544 = vst.msk [vmem:[#allocation3 + $0x78] sm:$0xff] %vm1528, %v1463
      %1545 = vst.msk [vmem:[#allocation3 + $0x80] sm:$0xff] %vm1528, %v1465
      %1546 = vst.msk [vmem:[#allocation3 + $0x88] sm:$0xff] %vm1528, %v1467
      %1547 = vst.msk [vmem:[#allocation3 + $0x90] sm:$0xff] %vm1528, %v1469
      %1548 = vst.msk [vmem:[#allocation3 + $0x98] sm:$0xff] %vm1528, %v1471
      %1549 = vst.msk [vmem:[#allocation3 + $0xa0] sm:$0xff] %vm1528, %v1473
      %1550 = vst.msk [vmem:[#allocation3 + $0xa8] sm:$0xff] %vm1528, %v1475
      %1551 = vst.msk [vmem:[#allocation3 + $0xb0] sm:$0xff] %vm1528, %v1477
      %1552 = vst.msk [vmem:[#allocation3 + $0xb8] sm:$0xff] %vm1528, %v1479
      %1553 = vst.msk [vmem:[#allocation3 + $0xc0] sm:$0xff] %vm1528, %v1481
      %1554 = vst.msk [vmem:[#allocation3 + $0xc8] sm:$0xff] %vm1528, %v1483
      %1555 = vst.msk [vmem:[#allocation3 + $0xd0] sm:$0xff] %vm1528, %v1485
      %1556 = vst.msk [vmem:[#allocation3 + $0xd8] sm:$0xff] %vm1528, %v1487
      %1557 = vst.msk [vmem:[#allocation3 + $0xe0] sm:$0xff] %vm1528, %v1489
      %1558 = vst.msk [vmem:[#allocation3 + $0xe8] sm:$0xff] %vm1528, %v1491
      %1559 = vst.msk [vmem:[#allocation3 + $0xf0] sm:$0xff] %vm1528, %v1493
      %1560 = vst.msk [vmem:[#allocation3 + $0xf8] sm:$0xff] %vm1528, %v1495
      %v1561 = vld [vmem:[%s1367 + $0x1] sm:$0xff]
      %v1562 = vld [vmem:[%s1367 + $0x9] sm:$0xff]
      %v1563 = vld [vmem:[%s1367 + $0x19] sm:$0xff]
      %v1564 = vld [vmem:[%s1367 + $0x21] sm:$0xff]
      %v1565 = vld [vmem:[%s1367 + $0x31] sm:$0xff]
      %v1566 = vld [vmem:[%s1367 + $0x39] sm:$0xff]
      %v1567 = vld [vmem:[%s1367 + $0x49] sm:$0xff]
      %v1568 = vld [vmem:[%s1367 + $0x51] sm:$0xff]
      %v1569 = vld [vmem:[%s1367 + $0x61] sm:$0xff]
      %v1570 = vld [vmem:[%s1367 + $0x69] sm:$0xff]
      %v1571 = vld [vmem:[%s1367 + $0x79] sm:$0xff]
      %v1572 = vld [vmem:[%s1367 + $0x81] sm:$0xff]
      %v1573 = vld [vmem:[%s1367 + $0x91] sm:$0xff]
      %v1574 = vld [vmem:[%s1367 + $0x99] sm:$0xff]
      %v1575 = vld [vmem:[%s1367 + $0xa9] sm:$0xff]
      %v1576 = vld [vmem:[%s1367 + $0xb1] sm:$0xff]
      %v1577 = vld [vmem:[%s1367 + $0xc1] sm:$0xff]
      %v1578 = vld [vmem:[%s1367 + $0xc9] sm:$0xff]
      %v1579 = vld [vmem:[%s1367 + $0xd9] sm:$0xff]
      %v1580 = vld [vmem:[%s1367 + $0xe1] sm:$0xff]
      %v1581 = vld [vmem:[%s1367 + $0xf1] sm:$0xff]
      %v1582 = vld [vmem:[%s1367 + $0xf9] sm:$0xff]
      %v1583 = vld [vmem:[%s1367 + $0x109] sm:$0xff]
      %v1584 = vld [vmem:[%s1367 + $0x111] sm:$0xff]
      %v1585 = vld [vmem:[%s1367 + $0x121] sm:$0xff]
      %v1586 = vld [vmem:[%s1367 + $0x129] sm:$0xff]
      %v1587 = vld [vmem:[%s1367 + $0x139] sm:$0xff]
      %v1588 = vld [vmem:[%s1367 + $0x141] sm:$0xff]
      %v1589 = vld [vmem:[%s1367 + $0x151] sm:$0xff]
      %v1590 = vld [vmem:[%s1367 + $0x159] sm:$0xff]
      %v1591 = vld [vmem:[%s1367 + $0x169] sm:$0xff]
      %v1592 = vld [vmem:[%s1367 + $0x171] sm:$0xff]
      %1625 = vrot.lane.b32.xlu0 %v1561, 56
      %v1626 = vpop.permute.xlu0 %1625
      %1627 = vrot.lane.b32.xlu0 %v1562, 56
      %v1628 = vpop.permute.xlu0 %1627
      %1629 = vrot.lane.b32.xlu0 %v1563, 56
      %v1630 = vpop.permute.xlu0 %1629
      %1631 = vrot.lane.b32.xlu0 %v1564, 56
      %v1632 = vpop.permute.xlu0 %1631
      %1633 = vrot.lane.b32.xlu0 %v1565, 56
      %v1634 = vpop.permute.xlu0 %1633
      %1635 = vrot.lane.b32.xlu0 %v1566, 56
      %v1636 = vpop.permute.xlu0 %1635
      %1637 = vrot.lane.b32.xlu0 %v1567, 56
      %v1638 = vpop.permute.xlu0 %1637
      %1639 = vrot.lane.b32.xlu0 %v1568, 56
      %v1640 = vpop.permute.xlu0 %1639
      %1641 = vrot.lane.b32.xlu0 %v1569, 56
      %v1642 = vpop.permute.xlu0 %1641
      %1643 = vrot.lane.b32.xlu0 %v1570, 56
      %v1644 = vpop.permute.xlu0 %1643
      %1645 = vrot.lane.b32.xlu0 %v1571, 56
      %v1646 = vpop.permute.xlu0 %1645
      %1647 = vrot.lane.b32.xlu0 %v1572, 56
      %v1648 = vpop.permute.xlu0 %1647
      %1649 = vrot.lane.b32.xlu0 %v1573, 56
      %v1650 = vpop.permute.xlu0 %1649
      %1651 = vrot.lane.b32.xlu0 %v1574, 56
      %v1652 = vpop.permute.xlu0 %1651
      %1653 = vrot.lane.b32.xlu0 %v1575, 56
      %v1654 = vpop.permute.xlu0 %1653
      %1655 = vrot.lane.b32.xlu0 %v1576, 56
      %v1656 = vpop.permute.xlu0 %1655
      %1657 = vrot.lane.b32.xlu0 %v1577, 56
      %v1658 = vpop.permute.xlu0 %1657
      %1659 = vrot.lane.b32.xlu0 %v1578, 56
      %v1660 = vpop.permute.xlu0 %1659
      %1661 = vrot.lane.b32.xlu0 %v1579, 56
      %v1662 = vpop.permute.xlu0 %1661
      %1663 = vrot.lane.b32.xlu0 %v1580, 56
      %v1664 = vpop.permute.xlu0 %1663
      %1665 = vrot.lane.b32.xlu0 %v1581, 56
      %v1666 = vpop.permute.xlu0 %1665
      %1667 = vrot.lane.b32.xlu0 %v1582, 56
      %v1668 = vpop.permute.xlu0 %1667
      %1669 = vrot.lane.b32.xlu0 %v1583, 56
      %v1670 = vpop.permute.xlu0 %1669
      %1671 = vrot.lane.b32.xlu0 %v1584, 56
      %v1672 = vpop.permute.xlu0 %1671
      %1673 = vrot.lane.b32.xlu0 %v1585, 56
      %v1674 = vpop.permute.xlu0 %1673
      %1675 = vrot.lane.b32.xlu0 %v1586, 56
      %v1676 = vpop.permute.xlu0 %1675
      %1677 = vrot.lane.b32.xlu0 %v1587, 56
      %v1678 = vpop.permute.xlu0 %1677
      %1679 = vrot.lane.b32.xlu0 %v1588, 56
      %v1680 = vpop.permute.xlu0 %1679
      %1681 = vrot.lane.b32.xlu0 %v1589, 56
      %v1682 = vpop.permute.xlu0 %1681
      %1683 = vrot.lane.b32.xlu0 %v1590, 56
      %v1684 = vpop.permute.xlu0 %1683
      %1685 = vrot.lane.b32.xlu0 %v1591, 56
      %v1686 = vpop.permute.xlu0 %1685
      %1687 = vrot.lane.b32.xlu0 %v1592, 56
      %v1688 = vpop.permute.xlu0 %1687
      %vm1721 = vcmask 523712
      %1722 = vst.msk [vmem:[#allocation3] sm:$0xff] %vm1721, %v1626
      %1723 = vst.msk [vmem:[#allocation3 + $0x8] sm:$0xff] %vm1721, %v1628
      %1724 = vst.msk [vmem:[#allocation3 + $0x10] sm:$0xff] %vm1721, %v1630
      %1725 = vst.msk [vmem:[#allocation3 + $0x18] sm:$0xff] %vm1721, %v1632
      %1726 = vst.msk [vmem:[#allocation3 + $0x20] sm:$0xff] %vm1721, %v1634
      %1727 = vst.msk [vmem:[#allocation3 + $0x28] sm:$0xff] %vm1721, %v1636
      %1728 = vst.msk [vmem:[#allocation3 + $0x30] sm:$0xff] %vm1721, %v1638
      %1729 = vst.msk [vmem:[#allocation3 + $0x38] sm:$0xff] %vm1721, %v1640
      %1730 = vst.msk [vmem:[#allocation3 + $0x40] sm:$0xff] %vm1721, %v1642
      %1731 = vst.msk [vmem:[#allocation3 + $0x48] sm:$0xff] %vm1721, %v1644
      %1732 = vst.msk [vmem:[#allocation3 + $0x50] sm:$0xff] %vm1721, %v1646
      %1733 = vst.msk [vmem:[#allocation3 + $0x58] sm:$0xff] %vm1721, %v1648
      %1734 = vst.msk [vmem:[#allocation3 + $0x60] sm:$0xff] %vm1721, %v1650
      %1735 = vst.msk [vmem:[#allocation3 + $0x68] sm:$0xff] %vm1721, %v1652
      %1736 = vst.msk [vmem:[#allocation3 + $0x70] sm:$0xff] %vm1721, %v1654
      %1737 = vst.msk [vmem:[#allocation3 + $0x78] sm:$0xff] %vm1721, %v1656
      %1738 = vst.msk [vmem:[#allocation3 + $0x80] sm:$0xff] %vm1721, %v1658
      %1739 = vst.msk [vmem:[#allocation3 + $0x88] sm:$0xff] %vm1721, %v1660
      %1740 = vst.msk [vmem:[#allocation3 + $0x90] sm:$0xff] %vm1721, %v1662
      %1741 = vst.msk [vmem:[#allocation3 + $0x98] sm:$0xff] %vm1721, %v1664
      %1742 = vst.msk [vmem:[#allocation3 + $0xa0] sm:$0xff] %vm1721, %v1666
      %1743 = vst.msk [vmem:[#allocation3 + $0xa8] sm:$0xff] %vm1721, %v1668
      %1744 = vst.msk [vmem:[#allocation3 + $0xb0] sm:$0xff] %vm1721, %v1670
      %1745 = vst.msk [vmem:[#allocation3 + $0xb8] sm:$0xff] %vm1721, %v1672
      %1746 = vst.msk [vmem:[#allocation3 + $0xc0] sm:$0xff] %vm1721, %v1674
      %1747 = vst.msk [vmem:[#allocation3 + $0xc8] sm:$0xff] %vm1721, %v1676
      %1748 = vst.msk [vmem:[#allocation3 + $0xd0] sm:$0xff] %vm1721, %v1678
      %1749 = vst.msk [vmem:[#allocation3 + $0xd8] sm:$0xff] %vm1721, %v1680
      %1750 = vst.msk [vmem:[#allocation3 + $0xe0] sm:$0xff] %vm1721, %v1682
      %1751 = vst.msk [vmem:[#allocation3 + $0xe8] sm:$0xff] %vm1721, %v1684
      %1752 = vst.msk [vmem:[#allocation3 + $0xf0] sm:$0xff] %vm1721, %v1686
      %1753 = vst.msk [vmem:[#allocation3 + $0xf8] sm:$0xff] %vm1721, %v1688
      %v1754 = vld [vmem:[%s1367 + $0x2] sm:$0xff]
      %v1755 = vld [vmem:[%s1367 + $0xa] sm:$0xff]
      %v1756 = vld [vmem:[%s1367 + $0x1a] sm:$0xff]
      %v1757 = vld [vmem:[%s1367 + $0x22] sm:$0xff]
      %v1758 = vld [vmem:[%s1367 + $0x32] sm:$0xff]
      %v1759 = vld [vmem:[%s1367 + $0x3a] sm:$0xff]
      %v1760 = vld [vmem:[%s1367 + $0x4a] sm:$0xff]
      %v1761 = vld [vmem:[%s1367 + $0x52] sm:$0xff]
      %v1762 = vld [vmem:[%s1367 + $0x62] sm:$0xff]
      %v1763 = vld [vmem:[%s1367 + $0x6a] sm:$0xff]
      %v1764 = vld [vmem:[%s1367 + $0x7a] sm:$0xff]
      %v1765 = vld [vmem:[%s1367 + $0x82] sm:$0xff]
      %v1766 = vld [vmem:[%s1367 + $0x92] sm:$0xff]
      %v1767 = vld [vmem:[%s1367 + $0x9a] sm:$0xff]
      %v1768 = vld [vmem:[%s1367 + $0xaa] sm:$0xff]
      %v1769 = vld [vmem:[%s1367 + $0xb2] sm:$0xff]
      %v1770 = vld [vmem:[%s1367 + $0xc2] sm:$0xff]
      %v1771 = vld [vmem:[%s1367 + $0xca] sm:$0xff]
      %v1772 = vld [vmem:[%s1367 + $0xda] sm:$0xff]
      %v1773 = vld [vmem:[%s1367 + $0xe2] sm:$0xff]
      %v1774 = vld [vmem:[%s1367 + $0xf2] sm:$0xff]
      %v1775 = vld [vmem:[%s1367 + $0xfa] sm:$0xff]
      %v1776 = vld [vmem:[%s1367 + $0x10a] sm:$0xff]
      %v1777 = vld [vmem:[%s1367 + $0x112] sm:$0xff]
      %v1778 = vld [vmem:[%s1367 + $0x122] sm:$0xff]
      %v1779 = vld [vmem:[%s1367 + $0x12a] sm:$0xff]
      %v1780 = vld [vmem:[%s1367 + $0x13a] sm:$0xff]
      %v1781 = vld [vmem:[%s1367 + $0x142] sm:$0xff]
      %v1782 = vld [vmem:[%s1367 + $0x152] sm:$0xff]
      %v1783 = vld [vmem:[%s1367 + $0x15a] sm:$0xff]
      %v1784 = vld [vmem:[%s1367 + $0x16a] sm:$0xff]
      %v1785 = vld [vmem:[%s1367 + $0x172] sm:$0xff]
      %1818 = vrot.lane.b32.xlu0 %v1754, 64
      %v1819 = vpop.permute.xlu0 %1818
      %1820 = vrot.lane.b32.xlu0 %v1755, 64
      %v1821 = vpop.permute.xlu0 %1820
      %1822 = vrot.lane.b32.xlu0 %v1756, 64
      %v1823 = vpop.permute.xlu0 %1822
      %1824 = vrot.lane.b32.xlu0 %v1757, 64
      %v1825 = vpop.permute.xlu0 %1824
      %1826 = vrot.lane.b32.xlu0 %v1758, 64
      %v1827 = vpop.permute.xlu0 %1826
      %1828 = vrot.lane.b32.xlu0 %v1759, 64
      %v1829 = vpop.permute.xlu0 %1828
      %1830 = vrot.lane.b32.xlu0 %v1760, 64
      %v1831 = vpop.permute.xlu0 %1830
      %1832 = vrot.lane.b32.xlu0 %v1761, 64
      %v1833 = vpop.permute.xlu0 %1832
      %1834 = vrot.lane.b32.xlu0 %v1762, 64
      %v1835 = vpop.permute.xlu0 %1834
      %1836 = vrot.lane.b32.xlu0 %v1763, 64
      %v1837 = vpop.permute.xlu0 %1836
      %1838 = vrot.lane.b32.xlu0 %v1764, 64
      %v1839 = vpop.permute.xlu0 %1838
      %1840 = vrot.lane.b32.xlu0 %v1765, 64
      %v1841 = vpop.permute.xlu0 %1840
      %1842 = vrot.lane.b32.xlu0 %v1766, 64
      %v1843 = vpop.permute.xlu0 %1842
      %1844 = vrot.lane.b32.xlu0 %v1767, 64
      %v1845 = vpop.permute.xlu0 %1844
      %1846 = vrot.lane.b32.xlu0 %v1768, 64
      %v1847 = vpop.permute.xlu0 %1846
      %1848 = vrot.lane.b32.xlu0 %v1769, 64
      %v1849 = vpop.permute.xlu0 %1848
      %1850 = vrot.lane.b32.xlu0 %v1770, 64
      %v1851 = vpop.permute.xlu0 %1850
      %1852 = vrot.lane.b32.xlu0 %v1771, 64
      %v1853 = vpop.permute.xlu0 %1852
      %1854 = vrot.lane.b32.xlu0 %v1772, 64
      %v1855 = vpop.permute.xlu0 %1854
      %1856 = vrot.lane.b32.xlu0 %v1773, 64
      %v1857 = vpop.permute.xlu0 %1856
      %1858 = vrot.lane.b32.xlu0 %v1774, 64
      %v1859 = vpop.permute.xlu0 %1858
      %1860 = vrot.lane.b32.xlu0 %v1775, 64
      %v1861 = vpop.permute.xlu0 %1860
      %1862 = vrot.lane.b32.xlu0 %v1776, 64
      %v1863 = vpop.permute.xlu0 %1862
      %1864 = vrot.lane.b32.xlu0 %v1777, 64
      %v1865 = vpop.permute.xlu0 %1864
      %1866 = vrot.lane.b32.xlu0 %v1778, 64
      %v1867 = vpop.permute.xlu0 %1866
      %1868 = vrot.lane.b32.xlu0 %v1779, 64
      %v1869 = vpop.permute.xlu0 %1868
      %1870 = vrot.lane.b32.xlu0 %v1780, 64
      %v1871 = vpop.permute.xlu0 %1870
      %1872 = vrot.lane.b32.xlu0 %v1781, 64
      %v1873 = vpop.permute.xlu0 %1872
      %1874 = vrot.lane.b32.xlu0 %v1782, 64
      %v1875 = vpop.permute.xlu0 %1874
      %1876 = vrot.lane.b32.xlu0 %v1783, 64
      %v1877 = vpop.permute.xlu0 %1876
      %1878 = vrot.lane.b32.xlu0 %v1784, 64
      %v1879 = vpop.permute.xlu0 %1878
      %1880 = vrot.lane.b32.xlu0 %v1785, 64
      %v1881 = vpop.permute.xlu0 %1880
      %vm1914 = vcmask 589312
      %1915 = vst.msk [vmem:[#allocation3] sm:$0xff] %vm1914, %v1819
      %1916 = vst.msk [vmem:[#allocation3 + $0x8] sm:$0xff] %vm1914, %v1821
      %1917 = vst.msk [vmem:[#allocation3 + $0x10] sm:$0xff] %vm1914, %v1823
      %1918 = vst.msk [vmem:[#allocation3 + $0x18] sm:$0xff] %vm1914, %v1825
      %1919 = vst.msk [vmem:[#allocation3 + $0x20] sm:$0xff] %vm1914, %v1827
      %1920 = vst.msk [vmem:[#allocation3 + $0x28] sm:$0xff] %vm1914, %v1829
      %1921 = vst.msk [vmem:[#allocation3 + $0x30] sm:$0xff] %vm1914, %v1831
      %1922 = vst.msk [vmem:[#allocation3 + $0x38] sm:$0xff] %vm1914, %v1833
      %1923 = vst.msk [vmem:[#allocation3 + $0x40] sm:$0xff] %vm1914, %v1835
      %1924 = vst.msk [vmem:[#allocation3 + $0x48] sm:$0xff] %vm1914, %v1837
      %1925 = vst.msk [vmem:[#allocation3 + $0x50] sm:$0xff] %vm1914, %v1839
      %1926 = vst.msk [vmem:[#allocation3 + $0x58] sm:$0xff] %vm1914, %v1841
      %1927 = vst.msk [vmem:[#allocation3 + $0x60] sm:$0xff] %vm1914, %v1843
      %1928 = vst.msk [vmem:[#allocation3 + $0x68] sm:$0xff] %vm1914, %v1845
      %1929 = vst.msk [vmem:[#allocation3 + $0x70] sm:$0xff] %vm1914, %v1847
      %1930 = vst.msk [vmem:[#allocation3 + $0x78] sm:$0xff] %vm1914, %v1849
      %1931 = vst.msk [vmem:[#allocation3 + $0x80] sm:$0xff] %vm1914, %v1851
      %1932 = vst.msk [vmem:[#allocation3 + $0x88] sm:$0xff] %vm1914, %v1853
      %1933 = vst.msk [vmem:[#allocation3 + $0x90] sm:$0xff] %vm1914, %v1855
      %1934 = vst.msk [vmem:[#allocation3 + $0x98] sm:$0xff] %vm1914, %v1857
      %1935 = vst.msk [vmem:[#allocation3 + $0xa0] sm:$0xff] %vm1914, %v1859
      %1936 = vst.msk [vmem:[#allocation3 + $0xa8] sm:$0xff] %vm1914, %v1861
      %1937 = vst.msk [vmem:[#allocation3 + $0xb0] sm:$0xff] %vm1914, %v1863
      %1938 = vst.msk [vmem:[#allocation3 + $0xb8] sm:$0xff] %vm1914, %v1865
      %1939 = vst.msk [vmem:[#allocation3 + $0xc0] sm:$0xff] %vm1914, %v1867
      %1940 = vst.msk [vmem:[#allocation3 + $0xc8] sm:$0xff] %vm1914, %v1869
      %1941 = vst.msk [vmem:[#allocation3 + $0xd0] sm:$0xff] %vm1914, %v1871
      %1942 = vst.msk [vmem:[#allocation3 + $0xd8] sm:$0xff] %vm1914, %v1873
      %1943 = vst.msk [vmem:[#allocation3 + $0xe0] sm:$0xff] %vm1914, %v1875
      %1944 = vst.msk [vmem:[#allocation3 + $0xe8] sm:$0xff] %vm1914, %v1877
      %1945 = vst.msk [vmem:[#allocation3 + $0xf0] sm:$0xff] %vm1914, %v1879
      %1946 = vst.msk [vmem:[#allocation3 + $0xf8] sm:$0xff] %vm1914, %v1881
      %v1947 = vld [vmem:[#allocation3] sm:$0xff]
      %v1948 = vld [vmem:[#allocation3 + $0x8] sm:$0xff]
      %v1949 = vld [vmem:[#allocation3 + $0x10] sm:$0xff]
      %v1950 = vld [vmem:[#allocation3 + $0x18] sm:$0xff]
      %v1951 = vld [vmem:[#allocation3 + $0x20] sm:$0xff]
      %v1952 = vld [vmem:[#allocation3 + $0x28] sm:$0xff]
      %v1953 = vld [vmem:[#allocation3 + $0x30] sm:$0xff]
      %v1954 = vld [vmem:[#allocation3 + $0x38] sm:$0xff]
      %v1955 = vld [vmem:[#allocation3 + $0x40] sm:$0xff]
      %v1956 = vld [vmem:[#allocation3 + $0x48] sm:$0xff]
      %v1957 = vld [vmem:[#allocation3 + $0x50] sm:$0xff]
      %v1958 = vld [vmem:[#allocation3 + $0x58] sm:$0xff]
      %v1959 = vld [vmem:[#allocation3 + $0x60] sm:$0xff]
      %v1960 = vld [vmem:[#allocation3 + $0x68] sm:$0xff]
      %v1961 = vld [vmem:[#allocation3 + $0x70] sm:$0xff]
      %v1962 = vld [vmem:[#allocation3 + $0x78] sm:$0xff]
      %v1963 = vld [vmem:[#allocation3 + $0x80] sm:$0xff]
      %v1964 = vld [vmem:[#allocation3 + $0x88] sm:$0xff]
      %v1965 = vld [vmem:[#allocation3 + $0x90] sm:$0xff]
      %v1966 = vld [vmem:[#allocation3 + $0x98] sm:$0xff]
      %v1967 = vld [vmem:[#allocation3 + $0xa0] sm:$0xff]
      %v1968 = vld [vmem:[#allocation3 + $0xa8] sm:$0xff]
      %v1969 = vld [vmem:[#allocation3 + $0xb0] sm:$0xff]
      %v1970 = vld [vmem:[#allocation3 + $0xb8] sm:$0xff]
      %v1971 = vld [vmem:[#allocation3 + $0xc0] sm:$0xff]
      %v1972 = vld [vmem:[#allocation3 + $0xc8] sm:$0xff]
      %v1973 = vld [vmem:[#allocation3 + $0xd0] sm:$0xff]
      %v1974 = vld [vmem:[#allocation3 + $0xd8] sm:$0xff]
      %v1975 = vld [vmem:[#allocation3 + $0xe0] sm:$0xff]
      %v1976 = vld [vmem:[#allocation3 + $0xe8] sm:$0xff]
      %v1977 = vld [vmem:[#allocation3 + $0xf0] sm:$0xff]
      %v1978 = vld [vmem:[#allocation3 + $0xf8] sm:$0xff]
      %v1979 = vld [vmem:[%s1] sm:$0xff]
      %v1980 = vld [vmem:[%s1 + $0x8] sm:$0xff]
      %v1981 = vld [vmem:[%s1 + $0x10] sm:$0xff]
      %v1982 = vld [vmem:[%s1 + $0x18] sm:$0xff]
      %v1983 = vld [vmem:[%s1 + $0x20] sm:$0xff]
      %v1984 = vld [vmem:[%s1 + $0x28] sm:$0xff]
      %v1985 = vld [vmem:[%s1 + $0x30] sm:$0xff]
      %v1986 = vld [vmem:[%s1 + $0x38] sm:$0xff]
      %v1987 = vld [vmem:[%s1 + $0x40] sm:$0xff]
      %v1988 = vld [vmem:[%s2] sm:$0x1]
      %v1990 = vperm.slane %v1988, 0
      %vm1992 = vcmask 588800
      %v1994 = vsel %vm1992, %v1947, 0
      %v1997 = vsel %vm1992, %v1948, 0
      %v2000 = vsel %vm1992, %v1949, 0
      %v2003 = vsel %vm1992, %v1950, 0
      %v2006 = vsel %vm1992, %v1951, 0
      %v2009 = vsel %vm1992, %v1952, 0
      %v2012 = vsel %vm1992, %v1953, 0
      %v2015 = vsel %vm1992, %v1954, 0
      %v2018 = vsel %vm1992, %v1955, 0
      %v2021 = vsel %vm1992, %v1956, 0
      %v2024 = vsel %vm1992, %v1957, 0
      %v2027 = vsel %vm1992, %v1958, 0
      %v2030 = vsel %vm1992, %v1959, 0
      %v2033 = vsel %vm1992, %v1960, 0
      %v2036 = vsel %vm1992, %v1961, 0
      %v2039 = vsel %vm1992, %v1962, 0
      %v2042 = vsel %vm1992, %v1963, 0
      %v2045 = vsel %vm1992, %v1964, 0
      %v2048 = vsel %vm1992, %v1965, 0
      %v2051 = vsel %vm1992, %v1966, 0
      %v2054 = vsel %vm1992, %v1967, 0
      %v2057 = vsel %vm1992, %v1968, 0
      %v2060 = vsel %vm1992, %v1969, 0
      %v2063 = vsel %vm1992, %v1970, 0
      %v2066 = vsel %vm1992, %v1971, 0
      %v2069 = vsel %vm1992, %v1972, 0
      %v2072 = vsel %vm1992, %v1973, 0
      %v2075 = vsel %vm1992, %v1974, 0
      %v2078 = vsel %vm1992, %v1975, 0
      %v2081 = vsel %vm1992, %v1976, 0
      %v2084 = vsel %vm1992, %v1977, 0
      %v2087 = vsel %vm1992, %v1978, 0
      %2089 = vmatpush.msra.mxu0 0.0
      %2090 = vmatpush.msra.mxu0 0.0
      %2091 = vmatpush.msra.mxu0 0.0
      %2092 = vmatpush.msra.mxu0 0.0
      %2093 = vmatpush.msra.mxu0 0.0
      %2094 = vmatpush.msra.mxu0 0.0
      %2095 = vmatpush.msra.mxu0 0.0
      %2096 = vmatpush.msra.mxu0 %v1987
      %2097 = vmatpush.msra.mxu0 %v1986
      %2098 = vmatpush.msra.mxu0 %v1985
      %2099 = vmatpush.msra.mxu0 %v1984
      %2100 = vmatpush.msra.mxu0 %v1983
      %2101 = vmatpush.msra.mxu0 %v1982
      %2102 = vmatpush.msra.mxu0 %v1981
      %2103 = vmatpush.msra.mxu0 %v1980
      %2104 = vmatpush.msra.mxu0 %v1979
      %2105 = vmatmul.f32.gmra.mxu0 %v1994
      %v2106 = vpop.f32.mrf.mxu0
      %v2107 = vadd.f32 %v1990, %v2106
      %2108 = vmatmul.f32.gmra.mxu0 %v1997
      %v2109 = vpop.f32.mrf.mxu0
      %v2110 = vadd.f32 %v1990, %v2109
      %2111 = vmatmul.f32.gmra.mxu0 %v2000
      %v2112 = vpop.f32.mrf.mxu0
      %v2113 = vadd.f32 %v1990, %v2112
      %2114 = vmatmul.f32.gmra.mxu0 %v2003
      %v2115 = vpop.f32.mrf.mxu0
      %v2116 = vadd.f32 %v1990, %v2115
      %2117 = vmatmul.f32.gmra.mxu0 %v2006
      %v2118 = vpop.f32.mrf.mxu0
      %v2119 = vadd.f32 %v1990, %v2118
      %2120 = vmatmul.f32.gmra.mxu0 %v2009
      %v2121 = vpop.f32.mrf.mxu0
      %v2122 = vadd.f32 %v1990, %v2121
      %2123 = vmatmul.f32.gmra.mxu0 %v2012
      %v2124 = vpop.f32.mrf.mxu0
      %v2125 = vadd.f32 %v1990, %v2124
      %2126 = vmatmul.f32.gmra.mxu0 %v2015
      %v2127 = vpop.f32.mrf.mxu0
      %v2128 = vadd.f32 %v1990, %v2127
      %2129 = vmatmul.f32.gmra.mxu0 %v2018
      %v2130 = vpop.f32.mrf.mxu0
      %v2131 = vadd.f32 %v1990, %v2130
      %2132 = vmatmul.f32.gmra.mxu0 %v2021
      %v2133 = vpop.f32.mrf.mxu0
      %v2134 = vadd.f32 %v1990, %v2133
      %2135 = vmatmul.f32.gmra.mxu0 %v2024
      %v2136 = vpop.f32.mrf.mxu0
      %v2137 = vadd.f32 %v1990, %v2136
      %2138 = vmatmul.f32.gmra.mxu0 %v2027
      %v2139 = vpop.f32.mrf.mxu0
      %v2140 = vadd.f32 %v1990, %v2139
      %2141 = vmatmul.f32.gmra.mxu0 %v2030
      %v2142 = vpop.f32.mrf.mxu0
      %v2143 = vadd.f32 %v1990, %v2142
      %2144 = vmatmul.f32.gmra.mxu0 %v2033
      %v2145 = vpop.f32.mrf.mxu0
      %v2146 = vadd.f32 %v1990, %v2145
      %2147 = vmatmul.f32.gmra.mxu0 %v2036
      %v2148 = vpop.f32.mrf.mxu0
      %v2149 = vadd.f32 %v1990, %v2148
      %2150 = vmatmul.f32.gmra.mxu0 %v2039
      %v2151 = vpop.f32.mrf.mxu0
      %v2152 = vadd.f32 %v1990, %v2151
      %2153 = vmatmul.f32.gmra.mxu0 %v2042
      %v2154 = vpop.f32.mrf.mxu0
      %v2155 = vadd.f32 %v1990, %v2154
      %2156 = vmatmul.f32.gmra.mxu0 %v2045
      %v2157 = vpop.f32.mrf.mxu0
      %v2158 = vadd.f32 %v1990, %v2157
      %2159 = vmatmul.f32.gmra.mxu0 %v2048
      %v2160 = vpop.f32.mrf.mxu0
      %v2161 = vadd.f32 %v1990, %v2160
      %2162 = vmatmul.f32.gmra.mxu0 %v2051
      %v2163 = vpop.f32.mrf.mxu0
      %v2164 = vadd.f32 %v1990, %v2163
      %2165 = vmatmul.f32.gmra.mxu0 %v2054
      %v2166 = vpop.f32.mrf.mxu0
      %v2167 = vadd.f32 %v1990, %v2166
      %2168 = vmatmul.f32.gmra.mxu0 %v2057
      %v2169 = vpop.f32.mrf.mxu0
      %v2170 = vadd.f32 %v1990, %v2169
      %2171 = vmatmul.f32.gmra.mxu0 %v2060
      %v2172 = vpop.f32.mrf.mxu0
      %v2173 = vadd.f32 %v1990, %v2172
      %2174 = vmatmul.f32.gmra.mxu0 %v2063
      %v2175 = vpop.f32.mrf.mxu0
      %v2176 = vadd.f32 %v1990, %v2175
      %2177 = vmatmul.f32.gmra.mxu0 %v2066
      %v2178 = vpop.f32.mrf.mxu0
      %v2179 = vadd.f32 %v1990, %v2178
      %2180 = vmatmul.f32.gmra.mxu0 %v2069
      %v2181 = vpop.f32.mrf.mxu0
      %v2182 = vadd.f32 %v1990, %v2181
      %2183 = vmatmul.f32.gmra.mxu0 %v2072
      %v2184 = vpop.f32.mrf.mxu0
      %v2185 = vadd.f32 %v1990, %v2184
      %2186 = vmatmul.f32.gmra.mxu0 %v2075
      %v2187 = vpop.f32.mrf.mxu0
      %v2188 = vadd.f32 %v1990, %v2187
      %2189 = vmatmul.f32.gmra.mxu0 %v2078
      %v2190 = vpop.f32.mrf.mxu0
      %v2191 = vadd.f32 %v1990, %v2190
      %2192 = vmatmul.f32.gmra.mxu0 %v2081
      %v2193 = vpop.f32.mrf.mxu0
      %v2194 = vadd.f32 %v1990, %v2193
      %2195 = vmatmul.f32.gmra.mxu0 %v2084
      %v2196 = vpop.f32.mrf.mxu0
      %v2197 = vadd.f32 %v1990, %v2196
      %2198 = vmatmul.f32.gmra.mxu0 %v2087
      %v2199 = vpop.f32.mrf.mxu0
      %v2200 = vadd.f32 %v1990, %v2199
      %2201 = vdwg.mxu0
      %2202 = vmatpush.msra.mxu0 %v2152
      %2203 = vmatpush.msra.mxu0 %v2149
      %2204 = vmatpush.msra.mxu0 %v2146
      %2205 = vmatpush.msra.mxu0 %v2143
      %2206 = vmatpush.msra.mxu0 %v2140
      %2207 = vmatpush.msra.mxu0 %v2137
      %2208 = vmatpush.msra.mxu0 %v2134
      %2209 = vmatpush.msra.mxu0 %v2131
      %2210 = vmatpush.msra.mxu0 %v2128
      %2211 = vmatpush.msra.mxu0 %v2125
      %2212 = vmatpush.msra.mxu0 %v2122
      %2213 = vmatpush.msra.mxu0 %v2119
      %2214 = vmatpush.msra.mxu0 %v2116
      %2215 = vmatpush.msra.mxu0 %v2113
      %2216 = vmatpush.msra.mxu0 %v2110
      %2217 = vmatpush.msra.mxu0 %v2107
      %2218 = vmatmul.f32.gmra.mxu0 0.00390625
      %v2219 = vpop.f32.mrf.mxu0
      %v2220 = vadd.f32 0.0, %v2219
      %2221 = vdwg.mxu0
      %2222 = vmatpush.msra.mxu0 %v2200
      %2223 = vmatpush.msra.mxu0 %v2197
      %2224 = vmatpush.msra.mxu0 %v2194
      %2225 = vmatpush.msra.mxu0 %v2191
      %2226 = vmatpush.msra.mxu0 %v2188
      %2227 = vmatpush.msra.mxu0 %v2185
      %2228 = vmatpush.msra.mxu0 %v2182
      %2229 = vmatpush.msra.mxu0 %v2179
      %2230 = vmatpush.msra.mxu0 %v2176
      %2231 = vmatpush.msra.mxu0 %v2173
      %2232 = vmatpush.msra.mxu0 %v2170
      %2233 = vmatpush.msra.mxu0 %v2167
      %2234 = vmatpush.msra.mxu0 %v2164
      %2235 = vmatpush.msra.mxu0 %v2161
      %2236 = vmatpush.msra.mxu0 %v2158
      %2237 = vmatpush.msra.mxu0 %v2155
      %2238 = vmatmul.f32.gmra.mxu0 0.00390625
      %v2239 = vpop.f32.mrf.mxu0
      %v2240 = vadd.f32 %v2220, %v2239
      %2241 = vdwg.mxu0
      %2274 = vrot.lane.b32.xlu0 %v2107, 120
      %v2275 = vpop.permute.xlu0 %2274
      %2276 = vrot.lane.b32.xlu0 %v2110, 120
      %v2277 = vpop.permute.xlu0 %2276
      %2278 = vrot.lane.b32.xlu0 %v2113, 120
      %v2279 = vpop.permute.xlu0 %2278
      %2280 = vrot.lane.b32.xlu0 %v2116, 120
      %v2281 = vpop.permute.xlu0 %2280
      %2282 = vrot.lane.b32.xlu0 %v2119, 120
      %v2283 = vpop.permute.xlu0 %2282
      %2284 = vrot.lane.b32.xlu0 %v2122, 120
      %v2285 = vpop.permute.xlu0 %2284
      %2286 = vrot.lane.b32.xlu0 %v2125, 120
      %v2287 = vpop.permute.xlu0 %2286
      %2288 = vrot.lane.b32.xlu0 %v2128, 120
      %v2289 = vpop.permute.xlu0 %2288
      %2290 = vrot.lane.b32.xlu0 %v2131, 120
      %v2291 = vpop.permute.xlu0 %2290
      %2292 = vrot.lane.b32.xlu0 %v2134, 120
      %v2293 = vpop.permute.xlu0 %2292
      %2294 = vrot.lane.b32.xlu0 %v2137, 120
      %v2295 = vpop.permute.xlu0 %2294
      %2296 = vrot.lane.b32.xlu0 %v2140, 120
      %v2297 = vpop.permute.xlu0 %2296
      %2298 = vrot.lane.b32.xlu0 %v2143, 120
      %v2299 = vpop.permute.xlu0 %2298
      %2300 = vrot.lane.b32.xlu0 %v2146, 120
      %v2301 = vpop.permute.xlu0 %2300
      %2302 = vrot.lane.b32.xlu0 %v2149, 120
      %v2303 = vpop.permute.xlu0 %2302
      %2304 = vrot.lane.b32.xlu0 %v2152, 120
      %v2305 = vpop.permute.xlu0 %2304
      %2306 = vrot.lane.b32.xlu0 %v2155, 120
      %v2307 = vpop.permute.xlu0 %2306
      %2308 = vrot.lane.b32.xlu0 %v2158, 120
      %v2309 = vpop.permute.xlu0 %2308
      %2310 = vrot.lane.b32.xlu0 %v2161, 120
      %v2311 = vpop.permute.xlu0 %2310
      %2312 = vrot.lane.b32.xlu0 %v2164, 120
      %v2313 = vpop.permute.xlu0 %2312
      %2314 = vrot.lane.b32.xlu0 %v2167, 120
      %v2315 = vpop.permute.xlu0 %2314
      %2316 = vrot.lane.b32.xlu0 %v2170, 120
      %v2317 = vpop.permute.xlu0 %2316
      %2318 = vrot.lane.b32.xlu0 %v2173, 120
      %v2319 = vpop.permute.xlu0 %2318
      %2320 = vrot.lane.b32.xlu0 %v2176, 120
      %v2321 = vpop.permute.xlu0 %2320
      %2322 = vrot.lane.b32.xlu0 %v2179, 120
      %v2323 = vpop.permute.xlu0 %2322
      %2324 = vrot.lane.b32.xlu0 %v2182, 120
      %v2325 = vpop.permute.xlu0 %2324
      %2326 = vrot.lane.b32.xlu0 %v2185, 120
      %v2327 = vpop.permute.xlu0 %2326
      %2328 = vrot.lane.b32.xlu0 %v2188, 120
      %v2329 = vpop.permute.xlu0 %2328
      %2330 = vrot.lane.b32.xlu0 %v2191, 120
      %v2331 = vpop.permute.xlu0 %2330
      %2332 = vrot.lane.b32.xlu0 %v2194, 120
      %v2333 = vpop.permute.xlu0 %2332
      %2334 = vrot.lane.b32.xlu0 %v2197, 120
      %v2335 = vpop.permute.xlu0 %2334
      %2336 = vrot.lane.b32.xlu0 %v2200, 120
      %v2337 = vpop.permute.xlu0 %2336
      %v2339 = vsel %vm227, %v2240, 0
      %v2341 = vsel %vm227, %v2275, 0
      %v2343 = vsel %vm227, %v2277, 0
      %v2345 = vsel %vm227, %v2279, 0
      %v2347 = vsel %vm227, %v2281, 0
      %v2349 = vsel %vm227, %v2283, 0
      %v2351 = vsel %vm227, %v2285, 0
      %v2353 = vsel %vm227, %v2287, 0
      %v2355 = vsel %vm227, %v2289, 0
      %v2357 = vsel %vm227, %v2291, 0
      %v2359 = vsel %vm227, %v2293, 0
      %v2361 = vsel %vm227, %v2295, 0
      %v2363 = vsel %vm227, %v2297, 0
      %v2365 = vsel %vm227, %v2299, 0
      %v2367 = vsel %vm227, %v2301, 0
      %v2369 = vsel %vm227, %v2303, 0
      %v2371 = vsel %vm227, %v2305, 0
      %v2373 = vsel %vm227, %v2307, 0
      %v2375 = vsel %vm227, %v2309, 0
      %v2377 = vsel %vm227, %v2311, 0
      %v2379 = vsel %vm227, %v2313, 0
      %v2381 = vsel %vm227, %v2315, 0
      %v2383 = vsel %vm227, %v2317, 0
      %v2385 = vsel %vm227, %v2319, 0
      %v2387 = vsel %vm227, %v2321, 0
      %v2389 = vsel %vm227, %v2323, 0
      %v2391 = vsel %vm227, %v2325, 0
      %v2393 = vsel %vm227, %v2327, 0
      %v2395 = vsel %vm227, %v2329, 0
      %v2397 = vsel %vm227, %v2331, 0
      %v2399 = vsel %vm227, %v2333, 0
      %v2401 = vsel %vm227, %v2335, 0
      %v2403 = vsel %vm227, %v2337, 0
      %2405 = vmatpush.xpose.msra.mxu0 %v2371
      %2406 = vmatpush.xpose.msra.mxu0 %v2369
      %2407 = vmatpush.xpose.msra.mxu0 %v2367
      %2408 = vmatpush.xpose.msra.mxu0 %v2365
      %2409 = vmatpush.xpose.msra.mxu0 %v2363
      %2410 = vmatpush.xpose.msra.mxu0 %v2361
      %2411 = vmatpush.xpose.msra.mxu0 %v2359
      %2412 = vmatpush.xpose.msra.mxu0 %v2357
      %2413 = vmatpush.xpose.msra.mxu0 %v2355
      %2414 = vmatpush.xpose.msra.mxu0 %v2353
      %2415 = vmatpush.xpose.msra.mxu0 %v2351
      %2416 = vmatpush.xpose.msra.mxu0 %v2349
      %2417 = vmatpush.xpose.msra.mxu0 %v2347
      %2418 = vmatpush.xpose.msra.mxu0 %v2345
      %2419 = vmatpush.xpose.msra.mxu0 %v2343
      %2420 = vmatpush.xpose.msra.mxu0 %v2341
      %2421 = vmatmul.f32.gmra.mxu0 %v2339
      %v2422 = vpop.f32.mrf.mxu0
      %v2423 = vadd.f32 0.0, %v2422
      %2424 = vdwg.mxu0
      %2425 = vmatpush.xpose.msra.mxu0 %v2403
      %2426 = vmatpush.xpose.msra.mxu0 %v2401
      %2427 = vmatpush.xpose.msra.mxu0 %v2399
      %2428 = vmatpush.xpose.msra.mxu0 %v2397
      %2429 = vmatpush.xpose.msra.mxu0 %v2395
      %2430 = vmatpush.xpose.msra.mxu0 %v2393
      %2431 = vmatpush.xpose.msra.mxu0 %v2391
      %2432 = vmatpush.xpose.msra.mxu0 %v2389
      %2433 = vmatpush.xpose.msra.mxu0 %v2387
      %2434 = vmatpush.xpose.msra.mxu0 %v2385
      %2435 = vmatpush.xpose.msra.mxu0 %v2383
      %2436 = vmatpush.xpose.msra.mxu0 %v2381
      %2437 = vmatpush.xpose.msra.mxu0 %v2379
      %2438 = vmatpush.xpose.msra.mxu0 %v2377
      %2439 = vmatpush.xpose.msra.mxu0 %v2375
      %2440 = vmatpush.xpose.msra.mxu0 %v2373
      %2441 = vmatmul.f32.gmra.mxu0 %v2339
      %v2442 = vpop.f32.mrf.mxu0
      %v2443 = vadd.f32 0.0, %v2442
      %2444 = vdwg.mxu0
      %vm2445 = vcmask 1040384
      %v2446 = vsel %vm2445, %v2423, -inf
      %v2447 = vsel %vm2445, %v2443, -inf
      %v2448 = vmax.f32 %v2446, %v2447
      %2449 = vmax.xlane.f32.xlu0 %v2448
      %v2450 = vpop.xlane.xlu0 %2449
      %v2451 = vsub.f32 %v2423, %v2450
      %v2452 = vsub.f32 %v2443, %v2450
      %v2453 = vmul.f32 %v2451, 1.442695
      %v2454 = vpow.pop %v2453
      %v2455 = vmul.f32 %v2452, 1.442695
      %v2456 = vpow.pop %v2455
      %v2457 = vsel %vm2445, %v2454, 0.0
      %v2458 = vsel %vm2445, %v2456, 0.0
      %v2459 = vadd.f32 %v2457, %v2458
      %2460 = vadd.xlane.f32.xlu0 %v2459
      %v2461 = vpop.xlane.xlu0 %2460
      %v2462 = vrcp.pop %v2461
      %v2463 = vmul.f32 %v2454, %v2462
      %v2464 = vmul.f32 %v2456, %v2462
      %2465 = vrot.lane.b32.xlu0 %v2107, 112
      %v2466 = vpop.permute.xlu0 %2465
      %2467 = vrot.lane.b32.xlu0 %v2110, 112
      %v2468 = vpop.permute.xlu0 %2467
      %2469 = vrot.lane.b32.xlu0 %v2113, 112
      %v2470 = vpop.permute.xlu0 %2469
      %2471 = vrot.lane.b32.xlu0 %v2116, 112
      %v2472 = vpop.permute.xlu0 %2471
      %2473 = vrot.lane.b32.xlu0 %v2119, 112
      %v2474 = vpop.permute.xlu0 %2473
      %2475 = vrot.lane.b32.xlu0 %v2122, 112
      %v2476 = vpop.permute.xlu0 %2475
      %2477 = vrot.lane.b32.xlu0 %v2125, 112
      %v2478 = vpop.permute.xlu0 %2477
      %2479 = vrot.lane.b32.xlu0 %v2128, 112
      %v2480 = vpop.permute.xlu0 %2479
      %2481 = vrot.lane.b32.xlu0 %v2131, 112
      %v2482 = vpop.permute.xlu0 %2481
      %2483 = vrot.lane.b32.xlu0 %v2134, 112
      %v2484 = vpop.permute.xlu0 %2483
      %2485 = vrot.lane.b32.xlu0 %v2137, 112
      %v2486 = vpop.permute.xlu0 %2485
      %2487 = vrot.lane.b32.xlu0 %v2140, 112
      %v2488 = vpop.permute.xlu0 %2487
      %2489 = vrot.lane.b32.xlu0 %v2143, 112
      %v2490 = vpop.permute.xlu0 %2489
      %2491 = vrot.lane.b32.xlu0 %v2146, 112
      %v2492 = vpop.permute.xlu0 %2491
      %2493 = vrot.lane.b32.xlu0 %v2149, 112
      %v2494 = vpop.permute.xlu0 %2493
      %2495 = vrot.lane.b32.xlu0 %v2152, 112
      %v2496 = vpop.permute.xlu0 %2495
      %2497 = vrot.lane.b32.xlu0 %v2155, 112
      %v2498 = vpop.permute.xlu0 %2497
      %2499 = vrot.lane.b32.xlu0 %v2158, 112
      %v2500 = vpop.permute.xlu0 %2499
      %2501 = vrot.lane.b32.xlu0 %v2161, 112
      %v2502 = vpop.permute.xlu0 %2501
      %2503 = vrot.lane.b32.xlu0 %v2164, 112
      %v2504 = vpop.permute.xlu0 %2503
      %2505 = vrot.lane.b32.xlu0 %v2167, 112
      %v2506 = vpop.permute.xlu0 %2505
      %2507 = vrot.lane.b32.xlu0 %v2170, 112
      %v2508 = vpop.permute.xlu0 %2507
      %2509 = vrot.lane.b32.xlu0 %v2173, 112
      %v2510 = vpop.permute.xlu0 %2509
      %2511 = vrot.lane.b32.xlu0 %v2176, 112
      %v2512 = vpop.permute.xlu0 %2511
      %2513 = vrot.lane.b32.xlu0 %v2179, 112
      %v2514 = vpop.permute.xlu0 %2513
      %2515 = vrot.lane.b32.xlu0 %v2182, 112
      %v2516 = vpop.permute.xlu0 %2515
      %2517 = vrot.lane.b32.xlu0 %v2185, 112
      %v2518 = vpop.permute.xlu0 %2517
      %2519 = vrot.lane.b32.xlu0 %v2188, 112
      %v2520 = vpop.permute.xlu0 %2519
      %2521 = vrot.lane.b32.xlu0 %v2191, 112
      %v2522 = vpop.permute.xlu0 %2521
      %2523 = vrot.lane.b32.xlu0 %v2194, 112
      %v2524 = vpop.permute.xlu0 %2523
      %2525 = vrot.lane.b32.xlu0 %v2197, 112
      %v2526 = vpop.permute.xlu0 %2525
      %2527 = vrot.lane.b32.xlu0 %v2200, 112
      %v2528 = vpop.permute.xlu0 %2527
      %2561 = vmatpush.msra.mxu0 %v2496
      %2562 = vmatpush.msra.mxu0 %v2494
      %2563 = vmatpush.msra.mxu0 %v2492
      %2564 = vmatpush.msra.mxu0 %v2490
      %2565 = vmatpush.msra.mxu0 %v2488
      %2566 = vmatpush.msra.mxu0 %v2486
      %2567 = vmatpush.msra.mxu0 %v2484
      %2568 = vmatpush.msra.mxu0 %v2482
      %2569 = vmatpush.msra.mxu0 %v2480
      %2570 = vmatpush.msra.mxu0 %v2478
      %2571 = vmatpush.msra.mxu0 %v2476
      %2572 = vmatpush.msra.mxu0 %v2474
      %2573 = vmatpush.msra.mxu0 %v2472
      %2574 = vmatpush.msra.mxu0 %v2470
      %2575 = vmatpush.msra.mxu0 %v2468
      %2576 = vmatpush.msra.mxu0 %v2466
      %2577 = vmatmul.f32.gmra.mxu0 %v2463
      %v2578 = vpop.f32.mrf.mxu0
      %v2579 = vadd.f32 0.0, %v2578
      %2580 = vdwg.mxu0
      %2581 = vmatpush.msra.mxu0 %v2528
      %2582 = vmatpush.msra.mxu0 %v2526
      %2583 = vmatpush.msra.mxu0 %v2524
      %2584 = vmatpush.msra.mxu0 %v2522
      %2585 = vmatpush.msra.mxu0 %v2520
      %2586 = vmatpush.msra.mxu0 %v2518
      %2587 = vmatpush.msra.mxu0 %v2516
      %2588 = vmatpush.msra.mxu0 %v2514
      %2589 = vmatpush.msra.mxu0 %v2512
      %2590 = vmatpush.msra.mxu0 %v2510
      %2591 = vmatpush.msra.mxu0 %v2508
      %2592 = vmatpush.msra.mxu0 %v2506
      %2593 = vmatpush.msra.mxu0 %v2504
      %2594 = vmatpush.msra.mxu0 %v2502
      %2595 = vmatpush.msra.mxu0 %v2500
      %2596 = vmatpush.msra.mxu0 %v2498
      %2597 = vmatmul.f32.gmra.mxu0 %v2464
      %v2598 = vpop.f32.mrf.mxu0
      %v2599 = vadd.f32 %v2579, %v2598
      %2600 = vdwg.mxu0
      %v2601 = vld [vmem:[%s3] sm:$0x1]
      %v2602 = vmul.f32 %v2599, %v2601
      %v2603 = vsel %vm236, %v2602, 0.0
      %2604 = vadd.xlane.f32.xlu0 %v2603
      %v2605 = vpop.xlane.xlu0 %2604
      %v2606 = vld [vmem:[#allocation4] sm:$0x1]
      %v2607 = vadd.f32 %v2605, %v2606
      %v2608 = vld [vmem:[%s221] sm:$0xff]
      %v2609 = vld [vmem:[%s221 + $0x8] sm:$0xff]
      %v2610 = vld [vmem:[%s221 + $0x10] sm:$0xff]
      %v2611 = vld [vmem:[%s221 + $0x18] sm:$0xff]
      %v2612 = vld [vmem:[%s221 + $0x20] sm:$0xff]
      %v2613 = vld [vmem:[%s221 + $0x28] sm:$0xff]
      %v2614 = vld [vmem:[%s221 + $0x30] sm:$0xff]
      %v2615 = vld [vmem:[%s221 + $0x38] sm:$0xff]
      %v2616 = vld [vmem:[%s221 + $0x40] sm:$0xff]
      %v2617 = vld [vmem:[%s221 + $0x48] sm:$0xff]
      %v2618 = vld [vmem:[%s221 + $0x50] sm:$0xff]
      %v2619 = vld [vmem:[%s221 + $0x58] sm:$0xff]
      %v2620 = vld [vmem:[%s221 + $0x60] sm:$0xff]
      %v2621 = vld [vmem:[%s221 + $0x68] sm:$0xff]
      %v2622 = vld [vmem:[%s221 + $0x70] sm:$0xff]
      %v2623 = vld [vmem:[%s221 + $0x78] sm:$0xff]
      %v2624 = vld [vmem:[%s221 + $0x80] sm:$0xff]
      %v2625 = vld [vmem:[%s221 + $0x88] sm:$0xff]
      %v2626 = vld [vmem:[%s221 + $0x90] sm:$0xff]
      %v2627 = vld [vmem:[%s221 + $0x98] sm:$0xff]
      %v2628 = vld [vmem:[%s221 + $0xa0] sm:$0xff]
      %v2629 = vld [vmem:[%s221 + $0xa8] sm:$0xff]
      %v2630 = vld [vmem:[%s221 + $0xb0] sm:$0xff]
      %v2631 = vld [vmem:[%s221 + $0xb8] sm:$0xff]
      %v2632 = vld [vmem:[%s221 + $0xc0] sm:$0xff]
      %v2633 = vld [vmem:[%s221 + $0xc8] sm:$0xff]
      %v2634 = vld [vmem:[%s221 + $0xd0] sm:$0xff]
      %v2635 = vld [vmem:[%s221 + $0xd8] sm:$0xff]
      %v2636 = vld [vmem:[%s221 + $0xe0] sm:$0xff]
      %v2637 = vld [vmem:[%s221 + $0xe8] sm:$0xff]
      %v2638 = vld [vmem:[%s221 + $0xf0] sm:$0xff]
      %v2639 = vld [vmem:[%s221 + $0xf8] sm:$0xff]
      %s2641 = vtos %v2607
      %v2642 = vstv %s2641
      %v2644 = vadd.f32 %v2608, %v2642
      %v2645 = vadd.f32 %v2609, %v2642
      %v2646 = vadd.f32 %v2610, %v2642
      %v2647 = vadd.f32 %v2611, %v2642
      %v2648 = vadd.f32 %v2612, %v2642
      %v2649 = vadd.f32 %v2613, %v2642
      %v2650 = vadd.f32 %v2614, %v2642
      %v2651 = vadd.f32 %v2615, %v2642
      %v2652 = vadd.f32 %v2616, %v2642
      %v2653 = vadd.f32 %v2617, %v2642
      %v2654 = vadd.f32 %v2618, %v2642
      %v2655 = vadd.f32 %v2619, %v2642
      %v2656 = vadd.f32 %v2620, %v2642
      %v2657 = vadd.f32 %v2621, %v2642
      %v2658 = vadd.f32 %v2622, %v2642
      %v2659 = vadd.f32 %v2623, %v2642
      %v2660 = vadd.f32 %v2624, %v2642
      %v2661 = vadd.f32 %v2625, %v2642
      %v2662 = vadd.f32 %v2626, %v2642
      %v2663 = vadd.f32 %v2627, %v2642
      %v2664 = vadd.f32 %v2628, %v2642
      %v2665 = vadd.f32 %v2629, %v2642
      %v2666 = vadd.f32 %v2630, %v2642
      %v2667 = vadd.f32 %v2631, %v2642
      %v2668 = vadd.f32 %v2632, %v2642
      %v2669 = vadd.f32 %v2633, %v2642
      %v2670 = vadd.f32 %v2634, %v2642
      %v2671 = vadd.f32 %v2635, %v2642
      %v2672 = vadd.f32 %v2636, %v2642
      %v2673 = vadd.f32 %v2637, %v2642
      %v2674 = vadd.f32 %v2638, %v2642
      %v2675 = vadd.f32 %v2639, %v2642
      %2676 = vst.msk [vmem:[%s226] sm:$0xff] %vm227, %v2644
      %2677 = vst.msk [vmem:[%s226 + $0x8] sm:$0xff] %vm227, %v2645
      %2678 = vst.msk [vmem:[%s226 + $0x10] sm:$0xff] %vm227, %v2646
      %2679 = vst.msk [vmem:[%s226 + $0x18] sm:$0xff] %vm227, %v2647
      %2680 = vst.msk [vmem:[%s226 + $0x20] sm:$0xff] %vm227, %v2648
      %2681 = vst.msk [vmem:[%s226 + $0x28] sm:$0xff] %vm227, %v2649
      %2682 = vst.msk [vmem:[%s226 + $0x30] sm:$0xff] %vm227, %v2650
      %2683 = vst.msk [vmem:[%s226 + $0x38] sm:$0xff] %vm227, %v2651
      %2684 = vst.msk [vmem:[%s226 + $0x40] sm:$0xff] %vm227, %v2652
      %2685 = vst.msk [vmem:[%s226 + $0x48] sm:$0xff] %vm227, %v2653
      %2686 = vst.msk [vmem:[%s226 + $0x50] sm:$0xff] %vm227, %v2654
      %2687 = vst.msk [vmem:[%s226 + $0x58] sm:$0xff] %vm227, %v2655
      %2688 = vst.msk [vmem:[%s226 + $0x60] sm:$0xff] %vm227, %v2656
      %2689 = vst.msk [vmem:[%s226 + $0x68] sm:$0xff] %vm227, %v2657
      %2690 = vst.msk [vmem:[%s226 + $0x70] sm:$0xff] %vm227, %v2658
      %2691 = vst.msk [vmem:[%s226 + $0x78] sm:$0xff] %vm227, %v2659
      %2692 = vst.msk [vmem:[%s226 + $0x80] sm:$0xff] %vm227, %v2660
      %2693 = vst.msk [vmem:[%s226 + $0x88] sm:$0xff] %vm227, %v2661
      %2694 = vst.msk [vmem:[%s226 + $0x90] sm:$0xff] %vm227, %v2662
      %2695 = vst.msk [vmem:[%s226 + $0x98] sm:$0xff] %vm227, %v2663
      %2696 = vst.msk [vmem:[%s226 + $0xa0] sm:$0xff] %vm227, %v2664
      %2697 = vst.msk [vmem:[%s226 + $0xa8] sm:$0xff] %vm227, %v2665
      %2698 = vst.msk [vmem:[%s226 + $0xb0] sm:$0xff] %vm227, %v2666
      %2699 = vst.msk [vmem:[%s226 + $0xb8] sm:$0xff] %vm227, %v2667
      %2700 = vst.msk [vmem:[%s226 + $0xc0] sm:$0xff] %vm227, %v2668
      %2701 = vst.msk [vmem:[%s226 + $0xc8] sm:$0xff] %vm227, %v2669
      %2702 = vst.msk [vmem:[%s226 + $0xd0] sm:$0xff] %vm227, %v2670
      %2703 = vst.msk [vmem:[%s226 + $0xd8] sm:$0xff] %vm227, %v2671
      %2704 = vst.msk [vmem:[%s226 + $0xe0] sm:$0xff] %vm227, %v2672
      %2705 = vst.msk [vmem:[%s226 + $0xe8] sm:$0xff] %vm227, %v2673
      %2706 = vst.msk [vmem:[%s226 + $0xf0] sm:$0xff] %vm227, %v2674
      %2707 = vst.msk [vmem:[%s226 + $0xf8] sm:$0xff] %vm227, %v2675
      %p2708 = scmp.lt.s32.totalorder %s18, 1
      %s2709 = scalar_select %p2708, %s18, 1
      %s2710 = smul.addr %s2709, 32
      %s2711 = smul.addr %s2710, 8
      %s2712 = scalar_lea.vmem %s5, %s2711
      // Predicated region
      $region41: #{tpu_custom_call.1} parent=39 // pred_check
        %p2713 = pneg %p146
      $region42: #{tpu_custom_call.1} parent=39 // pred_check_branch
        %2715 = sbr.rel (%p2713) target = $region44
      $region43: #{tpu_custom_call.1} parent=39 // pred_region
        _
      $region44: #{tpu_custom_call.1} parent=39 // pred_fallthru
        _
    $region40: #{tpu_custom_call.1} parent=5 // pred_fallthru
      _
    %p2716 = scmp.le.s32.totalorder 2, %s13
    // Predicated region
    $region45: #{tpu_custom_call.1} parent=5 // pred_check
      %p2717 = pneg %p2716
    $region46: #{tpu_custom_call.1} parent=5 // pred_check_branch
      %2719 = sbr.rel (%p2717) target = $region48
    $region47: #{tpu_custom_call.1} parent=5 // pred_region
      %s2720 = ssub.s32 %s13, 2
      // Predicated region
      $region49: #{tpu_custom_call.1} parent=47 // pred_check
        %p2721 = pneg %p152
      $region50: #{tpu_custom_call.1} parent=47 // pred_check_branch
        %2723 = sbr.rel (%p2721) target = $region52
      $region51: #{tpu_custom_call.1} parent=47 // pred_region
        %p2724 = scmp.lt.s32.totalorder %s19, 1
        %s2725 = scalar_select %p2724, %s19, 1
        %s2726 = smul.addr %s2725, 32
        %s2727 = smul.addr %s2726, 8
        %s2728 = scalar_lea.vmem %s5, %s2727
      $region52: #{tpu_custom_call.1} parent=47 // pred_fallthru
        _
    $region48: #{tpu_custom_call.1} parent=5 // pred_fallthru
      _
  $region6: #{tpu_custom_call.1} parent=0 // loop_footer
    %s17 = sadd.s32 1, %s13
  $region7: #{tpu_custom_call.1} parent=0 // loop_footer_branch
    %12 = sbr.rel target = $region3
  $region8: #{tpu_custom_call.1} parent=0 // loop_exit
    _

</llo_original>
